<compile_context>
chip_gen: v6e
topology: v6e:2x2x1
jax: 0.10.0
libtpu: 0.0.40
codegen_flags: <defaults>
</compile_context>

<pallas_src>
import functools

import jax
import jax.numpy as jnp
import numpy as np
from jax.experimental import pallas as pl
from jax.experimental.pallas import tpu as pltpu

# ----------------------------- hyper-params ---------------------------------
FIELD_DIMS = [10, 20]
EMBED_DIM = 16
WORD_DIM = 32
IMG_SIZE = 16
CHANNEL_LIST = [4, 8]
KERNEL_SIZE = 3
STRIDE = 2
PADDING = 1
HIDDEN_DIM = 64
LATENT_DIM = 16
BATCH = 8


# ------------------- conv -> dense GEMM (weight repacking) -------------------
def conv_as_gemm(w, b, H, W, stride, padding):
    """Pack a PyTorch-semantics Conv2d weight (Cout,Cin,k,k) into a dense
    (Cin*H*W, Cout*OH*OW) matrix acting on the NCHW-flattened (unpadded)
    input.  Zero padding is folded in by dropping out-of-bounds taps.
    Output column order is (Cout, OH, OW) row-major == `.view(B,-1)` order."""
    Cout, Cin, k, _ = w.shape
    OH = (H + 2 * padding - k) // stride + 1
    OW = (W + 2 * padding - k) // stride + 1
    rows, cols, widx = [], [], []
    for co in range(Cout):
        for oh in range(OH):
            for ow in range(OW):
                col = (co * OH + oh) * OW + ow
                for ci in range(Cin):
                    for ki in range(k):
                        ih = oh * stride + ki - padding
                        if ih < 0 or ih >= H:
                            continue
                        for kj in range(k):
                            iw = ow * stride + kj - padding
                            if iw < 0 or iw >= W:
                                continue
                            rows.append((ci * H + ih) * W + iw)
                            cols.append(col)
                            widx.append(((co * Cin + ci) * k + ki) * k + kj)
    rows = np.asarray(rows, np.int32)
    cols = np.asarray(cols, np.int32)
    widx = np.asarray(widx, np.int32)
    vals = w.reshape(-1)[widx].astype(jnp.float32)
    T = jnp.zeros((Cin * H * W, Cout * OH * OW), jnp.float32).at[rows, cols].add(vals)
    bias_full = jnp.repeat(b.astype(jnp.float32), OH * OW)          # (Cout*OH*OW,)
    return T, bias_full, OH, OW


# ----------------------------- fused Pallas kernel ---------------------------
def _cvae_fused_kernel(
        xfeat_ref, img_ref, ut_ref, bt_ref, eps_ref,
        t1_ref, b1_ref, t2_ref, b2_ref,
        tw_ref, tb_ref,
        e1w_ref, e1b_ref, e2w_ref, e2b_ref,
        d1w_ref, d1b_ref, d2w_ref, d2b_ref,
        out_ref, mulv_ref,
        *, latent_dim, feat_sizes):
    f32 = jnp.float32

    # ---- CNN: both conv layers as lane-dense GEMMs (Toeplitz-packed weights)
    c1 = jnp.dot(img_ref[...], t1_ref[...], preferred_element_type=f32) + b1_ref[...]
    c1 = jnp.maximum(c1, 0.0)                                         # (TB, 256)
    img_feat = jnp.dot(c1, t2_ref[...], preferred_element_type=f32) + b2_ref[...]
    img_feat = jnp.maximum(img_feat, 0.0)                             # (TB, 128)
    # TODO(synk): CNN_Base batchnorm/dropout branches not modeled (disabled in config).

    # ---- shared text projection, both streams fused in one kernel
    tw = tw_ref[...]
    tb = tb_ref[...]
    ut = jnp.dot(ut_ref[...], tw, preferred_element_type=f32) + tb    # (TB, 16)
    bt = jnp.dot(bt_ref[...], tw, preferred_element_type=f32) + tb    # (TB, 16)

    # ---- encoder L1: split the weight rows instead of concatenating features
    n_x, n_img, n_t = feat_sizes
    e1w = e1w_ref[...]                                                # (192, 64)
    h1 = jnp.dot(xfeat_ref[...], e1w[0:n_x, :], preferred_element_type=f32)
    h1 = h1 + jnp.dot(img_feat, e1w[n_x:n_x + n_img, :], preferred_element_type=f32)
    h1 = h1 + jnp.dot(ut, e1w[n_x + n_img:n_x + n_img + n_t, :],
                      preferred_element_type=f32)
    h1 = h1 + jnp.dot(bt, e1w[n_x + n_img + n_t:, :], preferred_element_type=f32)
    h1 = jnp.maximum(h1 + e1b_ref[...], 0.0)                          # (TB, 64)

    # ---- encoder L2 -> single lane-dense (TB, 2*latent) output
    y = jnp.dot(h1, e2w_ref[...], preferred_element_type=f32) + e2b_ref[...]
    mulv_ref[...] = y                                                 # [mu | log_var]

    # ---- reparameterize (z stays in vregs / VMEM)
    mu = y[:, :latent_dim]
    log_var = y[:, latent_dim:]
    z = mu + eps_ref[...] * jnp.exp(0.5 * log_var)                    # (TB, 16)

    # ---- decoder: L1 on MXU, L2 (N=1) as a VPU/XLU row reduction
    d1 = jnp.dot(z, d1w_ref[...], preferred_element_type=f32) + d1b_ref[...]
    d1 = jnp.maximum(d1, 0.0)                                         # (TB, 64)
    out_ref[...] = jnp.sum(d1 * d2w_ref[...], axis=1, keepdims=True) + d2b_ref[...]


def _fused_call(params, x_feat, img_flat, users_text, books_text, eps):
    B = x_feat.shape[0]
    TB = B                      # single batch tile; grow B and TB<=128 shards across TCs
    grid = (B // TB,)

    n_x = x_feat.shape[1]
    n_img = params["conv2_T"].shape[1]
    n_t = EMBED_DIM

    def act(n):                       # batch-tiled activations
        return pl.BlockSpec((TB, n), lambda i: (i, 0))

    def const(a):                     # grid-invariant weights / biases
        return pl.BlockSpec(a.shape, lambda i: (0, 0))

    def row(v):                       # 1-D bias -> (1, N) for broadcast add
        return v.reshape(1, -1)

    t1, b1 = params["conv1_T"], row(params["conv1_b"])
    t2, b2 = params["conv2_T"], row(params["conv2_b"])
    tw, tb = params["text_w"], row(params["text_b"])
    e1w, e1b = params["enc1_w"], row(params["enc1_b"])
    e2w, e2b = params["enc2_w"], row(params["enc2_b"])
    d1w, d1b = params["dec1_w"], row(params["dec1_b"])
    d2w = params["dec2_w"].reshape(1, -1)      # (1, HIDDEN): row vector for reduction
    d2b = row(params["dec2_b"])

    kernel = functools.partial(_cvae_fused_kernel,
                               latent_dim=LATENT_DIM,
                               feat_sizes=(n_x, n_img, n_t))

    out, mulv = pl.pallas_call(
        kernel,
        out_shape=(jax.ShapeDtypeStruct((B, 1), jnp.float32),
                   jax.ShapeDtypeStruct((B, 2 * LATENT_DIM), jnp.float32)),
        grid=grid,
        in_specs=[act(n_x), act(img_flat.shape[1]), act(WORD_DIM), act(WORD_DIM),
                  act(LATENT_DIM),
                  const(t1), const(b1), const(t2), const(b2),
                  const(tw), const(tb),
                  const(e1w), const(e1b), const(e2w), const(e2b),
                  const(d1w), const(d1b), const(d2w), const(d2b)],
        out_specs=(pl.BlockSpec((TB, 1), lambda i: (i, 0)),
                   pl.BlockSpec((TB, 2 * LATENT_DIM), lambda i: (i, 0))),
        compiler_params=pltpu.CompilerParams(
            dimension_semantics=("parallel",)),
    )(x_feat, img_flat, users_text, books_text, eps,
      t1, b1, t2, b2, tw, tb, e1w, e1b, e2w, e2b, d1w, d1b, d2w, d2b)
    return out, mulv


# ----------------------------- parameter init --------------------------------
def init_params(key):
    ks = jax.random.split(key, 12)

    def normal(k, shape, scale=0.05):
        return scale * jax.random.normal(k, shape, dtype=jnp.float32)

    # raw conv weights (PyTorch layout), then pack into dense GEMM matrices once
    ck = jax.random.split(ks[0], len(CHANNEL_LIST) * 2)
    cw1 = normal(ck[0], (CHANNEL_LIST[0], 3, KERNEL_SIZE, KERNEL_SIZE))
    cb1 = normal(ck[1], (CHANNEL_LIST[0],))
    cw2 = normal(ck[2], (CHANNEL_LIST[1], CHANNEL_LIST[0], KERNEL_SIZE, KERNEL_SIZE))
    cb2 = normal(ck[3], (CHANNEL_LIST[1],))

    T1, b1_full, OH1, OW1 = conv_as_gemm(cw1, cb1, IMG_SIZE, IMG_SIZE, STRIDE, PADDING)
    T2, b2_full, OH2, OW2 = conv_as_gemm(cw2, cb2, OH1, OW1, STRIDE, PADDING)

    cnn_flat = CHANNEL_LIST[-1] * OH2 * OW2
    input_dim = len(FIELD_DIMS) * EMBED_DIM + cnn_flat + 2 * EMBED_DIM

    total_tokens = int(sum(FIELD_DIMS))
    params = dict(
        emb_table=normal(ks[1], (total_tokens, EMBED_DIM)),
        offsets=jnp.array([0] + list(np.cumsum(FIELD_DIMS)[:-1]), dtype=jnp.int32),
        conv1_T=T1, conv1_b=b1_full,          # (768, 256), (256,)
        conv2_T=T2, conv2_b=b2_full,          # (256, 128), (128,)
        text_w=normal(ks[2], (WORD_DIM, EMBED_DIM)),
        text_b=normal(ks[3], (EMBED_DIM,)),
        enc1_w=normal(ks[4], (input_dim, HIDDEN_DIM)),
        enc1_b=normal(ks[5], (HIDDEN_DIM,)),
        enc2_w=normal(ks[6], (HIDDEN_DIM, 2 * LATENT_DIM)),
        enc2_b=normal(ks[7], (2 * LATENT_DIM,)),
        dec1_w=normal(ks[8], (LATENT_DIM, HIDDEN_DIM)),
        dec1_b=normal(ks[9], (HIDDEN_DIM,)),
        dec2_w=normal(ks[10], (HIDDEN_DIM, 1)),
        dec2_b=normal(ks[11], (1,)),
    )
    return params


# ----------------------------- forward ---------------------------------------
def cvae_forward(params, x_cat, images, users_text, books_text, eps):
    B = x_cat.shape[0]

    # FeaturesEmbedding: offsets + lookup + flatten (tiny gather kept in XLA glue).
    idx = x_cat + params["offsets"][None, :]
    x_feat = jnp.take(params["emb_table"], idx, axis=0).reshape(B, -1)
    x_feat = x_feat.astype(jnp.float32)

    # NCHW image flattened once; both conv layers run inside the fused kernel.
    img_flat = images.reshape(B, -1).astype(jnp.float32)

    out, mulv = _fused_call(params, x_feat, img_flat,
                            users_text.astype(jnp.float32),
                            books_text.astype(jnp.float32),
                            eps.astype(jnp.float32))
    mu = mulv[:, :LATENT_DIM]
    log_var = mulv[:, LATENT_DIM:]
    return out, mu, log_var


# ----------------------------- main -------------------------------------------
if __name__ == "__main__":
    key = jax.random.PRNGKey(0)
    k_param, k_cat0, k_cat1, k_img, k_ut, k_bt, k_eps = jax.random.split(key, 7)

    params = init_params(k_param)

    cat0 = jax.random.randint(k_cat0, (BATCH, 1), 0, FIELD_DIMS[0], dtype=jnp.int32)
    cat1 = jax.random.randint(k_cat1, (BATCH, 1), 0, FIELD_DIMS[1], dtype=jnp.int32)
    x_cat = jnp.concatenate([cat0, cat1], axis=1)                        # (B, 2) int32
    images = jax.random.normal(k_img, (BATCH, 3, IMG_SIZE, IMG_SIZE), jnp.float32)
    users_text = jax.random.normal(k_ut, (BATCH, WORD_DIM), jnp.float32)
    books_text = jax.random.normal(k_bt, (BATCH, WORD_DIM), jnp.float32)
    # torch.randn_like(std) in reparameterize -> fixed key here for determinism
    eps = jax.random.normal(k_eps, (BATCH, LATENT_DIM), jnp.float32)

    fwd = jax.jit(cvae_forward)
    out, mu, log_var = fwd(params, x_cat, images, users_text, books_text, eps)
    jax.block_until_ready((out, mu, log_var))

    assert out.shape == (BATCH, 1)
    assert mu.shape == (BATCH, LATENT_DIM)
    assert log_var.shape == (BATCH, LATENT_DIM)
    assert bool(jnp.all(jnp.isfinite(out)))
    print("KERNEL_OK")
</pallas_src>

<mosaic_0001>
module attributes {stable_mosaic.version = 11 : i64} {
  func.func @_cvae_fused_kernel(%arg0: i32, %arg1: memref<8x32xf32, #tpu.memory_space<vmem>>, %arg2: memref<8x768xf32, #tpu.memory_space<vmem>>, %arg3: memref<8x32xf32, #tpu.memory_space<vmem>>, %arg4: memref<8x32xf32, #tpu.memory_space<vmem>>, %arg5: memref<8x16xf32, #tpu.memory_space<vmem>>, %arg6: memref<768x256xf32, #tpu.memory_space<vmem>>, %arg7: memref<1x256xf32, #tpu.memory_space<vmem>>, %arg8: memref<256x128xf32, #tpu.memory_space<vmem>>, %arg9: memref<1x128xf32, #tpu.memory_space<vmem>>, %arg10: memref<32x16xf32, #tpu.memory_space<vmem>>, %arg11: memref<1x16xf32, #tpu.memory_space<vmem>>, %arg12: memref<192x64xf32, #tpu.memory_space<vmem>>, %arg13: memref<1x64xf32, #tpu.memory_space<vmem>>, %arg14: memref<64x32xf32, #tpu.memory_space<vmem>>, %arg15: memref<1x32xf32, #tpu.memory_space<vmem>>, %arg16: memref<16x64xf32, #tpu.memory_space<vmem>>, %arg17: memref<1x64xf32, #tpu.memory_space<vmem>>, %arg18: memref<1x64xf32, #tpu.memory_space<vmem>>, %arg19: memref<1x1xf32, #tpu.memory_space<vmem>>, %arg20: memref<8x1xf32, #tpu.memory_space<vmem>>, %arg21: memref<8x32xf32, #tpu.memory_space<vmem>>) attributes {dimension_semantics = [#tpu.dimension_semantics<parallel>], iteration_bounds = array<i64: 1>, scalar_prefetch = 0 : i64, scratch_operands = 0 : i64, tpu.core_type = #tpu.core_type<tc>, window_params = [{transform_indices = @transform_0, window_bounds = array<i64: 8, 32>}, {transform_indices = @transform_1, window_bounds = array<i64: 8, 768>}, {transform_indices = @transform_2, window_bounds = array<i64: 8, 32>}, {transform_indices = @transform_3, window_bounds = array<i64: 8, 32>}, {transform_indices = @transform_4, window_bounds = array<i64: 8, 16>}, {pipeline_mode = #tpu.pipeline_mode<synchronous>, transform_indices = @transform_5, window_bounds = array<i64: 768, 256>}, {pipeline_mode = #tpu.pipeline_mode<synchronous>, transform_indices = @transform_6, window_bounds = array<i64: 1, 256>}, {pipeline_mode = #tpu.pipeline_mode<synchronous>, transform_indices = @transform_7, window_bounds = array<i64: 256, 128>}, {pipeline_mode = #tpu.pipeline_mode<synchronous>, transform_indices = @transform_8, window_bounds = array<i64: 1, 128>}, {pipeline_mode = #tpu.pipeline_mode<synchronous>, transform_indices = @transform_9, window_bounds = array<i64: 32, 16>}, {pipeline_mode = #tpu.pipeline_mode<synchronous>, transform_indices = @transform_10, window_bounds = array<i64: 1, 16>}, {pipeline_mode = #tpu.pipeline_mode<synchronous>, transform_indices = @transform_11, window_bounds = array<i64: 192, 64>}, {pipeline_mode = #tpu.pipeline_mode<synchronous>, transform_indices = @transform_12, window_bounds = array<i64: 1, 64>}, {pipeline_mode = #tpu.pipeline_mode<synchronous>, transform_indices = @transform_13, window_bounds = array<i64: 64, 32>}, {pipeline_mode = #tpu.pipeline_mode<synchronous>, transform_indices = @transform_14, window_bounds = array<i64: 1, 32>}, {pipeline_mode = #tpu.pipeline_mode<synchronous>, transform_indices = @transform_15, window_bounds = array<i64: 16, 64>}, {pipeline_mode = #tpu.pipeline_mode<synchronous>, transform_indices = @transform_16, window_bounds = array<i64: 1, 64>}, {pipeline_mode = #tpu.pipeline_mode<synchronous>, transform_indices = @transform_17, window_bounds = array<i64: 1, 64>}, {pipeline_mode = #tpu.pipeline_mode<synchronous>, transform_indices = @transform_18, window_bounds = array<i64: 1, 1>}, {transform_indices = @transform_19, window_bounds = array<i64: 8, 1>}, {transform_indices = @transform_20, window_bounds = array<i64: 8, 32>}]} {
    %c0 = arith.constant 0 : index
    %c0_0 = arith.constant 0 : index
    %0 = vector.load %arg2[%c0, %c0_0] : memref<8x768xf32, #tpu.memory_space<vmem>>, vector<8x768xf32>
    %c0_1 = arith.constant 0 : index
    %c0_2 = arith.constant 0 : index
    %1 = vector.load %arg6[%c0_1, %c0_2] : memref<768x256xf32, #tpu.memory_space<vmem>>, vector<768x256xf32>
    %cst = arith.constant dense<0.000000e+00> : vector<8x256xf32>
    %2 = tpu.matmul %0, %1, %cst {dimension_numbers = #tpu.dot_dimension_numbers<[1], [0], [0], [1], [0, 0, 1, 1], [], []>} : vector<8x768xf32>, vector<768x256xf32>, vector<8x256xf32> -> vector<8x256xf32>
    %c0_3 = arith.constant 0 : index
    %c0_4 = arith.constant 0 : index
    %3 = vector.load %arg7[%c0_3, %c0_4] : memref<1x256xf32, #tpu.memory_space<vmem>>, vector<1x256xf32>
    %4 = vector.broadcast %3 : vector<1x256xf32> to vector<8x256xf32>
    %5 = arith.addf %2, %4 : vector<8x256xf32>
    %cst_5 = arith.constant 0.000000e+00 : f32
    %6 = vector.broadcast %cst_5 : f32 to vector<8x256xf32>
    %7 = arith.maximumf %5, %6 : vector<8x256xf32>
    %c0_6 = arith.constant 0 : index
    %c0_7 = arith.constant 0 : index
    %8 = vector.load %arg8[%c0_6, %c0_7] : memref<256x128xf32, #tpu.memory_space<vmem>>, vector<256x128xf32>
    %cst_8 = arith.constant dense<0.000000e+00> : vector<8x128xf32>
    %9 = tpu.matmul %7, %8, %cst_8 {dimension_numbers = #tpu.dot_dimension_numbers<[1], [0], [0], [1], [0, 0, 1, 1], [], []>} : vector<8x256xf32>, vector<256x128xf32>, vector<8x128xf32> -> vector<8x128xf32>
    %c0_9 = arith.constant 0 : index
    %c0_10 = arith.constant 0 : index
    %10 = vector.load %arg9[%c0_9, %c0_10] : memref<1x128xf32, #tpu.memory_space<vmem>>, vector<1x128xf32>
    %11 = vector.broadcast %10 : vector<1x128xf32> to vector<8x128xf32>
    %12 = arith.addf %9, %11 : vector<8x128xf32>
    %cst_11 = arith.constant 0.000000e+00 : f32
    %13 = vector.broadcast %cst_11 : f32 to vector<8x128xf32>
    %14 = arith.maximumf %12, %13 : vector<8x128xf32>
    %c0_12 = arith.constant 0 : index
    %c0_13 = arith.constant 0 : index
    %15 = vector.load %arg10[%c0_12, %c0_13] : memref<32x16xf32, #tpu.memory_space<vmem>>, vector<32x16xf32>
    %c0_14 = arith.constant 0 : index
    %c0_15 = arith.constant 0 : index
    %16 = vector.load %arg11[%c0_14, %c0_15] : memref<1x16xf32, #tpu.memory_space<vmem>>, vector<1x16xf32>
    %c0_16 = arith.constant 0 : index
    %c0_17 = arith.constant 0 : index
    %17 = vector.load %arg3[%c0_16, %c0_17] : memref<8x32xf32, #tpu.memory_space<vmem>>, vector<8x32xf32>
    %cst_18 = arith.constant dense<0.000000e+00> : vector<8x16xf32>
    %18 = tpu.matmul %17, %15, %cst_18 {dimension_numbers = #tpu.dot_dimension_numbers<[1], [0], [0], [1], [0, 0, 1, 1], [], []>} : vector<8x32xf32>, vector<32x16xf32>, vector<8x16xf32> -> vector<8x16xf32>
    %19 = vector.broadcast %16 : vector<1x16xf32> to vector<8x16xf32>
    %20 = arith.addf %18, %19 : vector<8x16xf32>
    %c0_19 = arith.constant 0 : index
    %c0_20 = arith.constant 0 : index
    %21 = vector.load %arg4[%c0_19, %c0_20] : memref<8x32xf32, #tpu.memory_space<vmem>>, vector<8x32xf32>
    %cst_21 = arith.constant dense<0.000000e+00> : vector<8x16xf32>
    %22 = tpu.matmul %21, %15, %cst_21 {dimension_numbers = #tpu.dot_dimension_numbers<[1], [0], [0], [1], [0, 0, 1, 1], [], []>} : vector<8x32xf32>, vector<32x16xf32>, vector<8x16xf32> -> vector<8x16xf32>
    %23 = vector.broadcast %16 : vector<1x16xf32> to vector<8x16xf32>
    %24 = arith.addf %22, %23 : vector<8x16xf32>
    %c0_22 = arith.constant 0 : index
    %c0_23 = arith.constant 0 : index
    %25 = vector.load %arg12[%c0_22, %c0_23] : memref<192x64xf32, #tpu.memory_space<vmem>>, vector<192x64xf32>
    %c0_24 = arith.constant 0 : index
    %c0_25 = arith.constant 0 : index
    %26 = vector.load %arg1[%c0_24, %c0_25] : memref<8x32xf32, #tpu.memory_space<vmem>>, vector<8x32xf32>
    %27 = vector.extract_strided_slice %25 {offsets = [0, 0], sizes = [32, 64], strides = [1, 1]} : vector<192x64xf32> to vector<32x64xf32>
    %cst_26 = arith.constant dense<0.000000e+00> : vector<8x64xf32>
    %28 = tpu.matmul %26, %27, %cst_26 {dimension_numbers = #tpu.dot_dimension_numbers<[1], [0], [0], [1], [0, 0, 1, 1], [], []>} : vector<8x32xf32>, vector<32x64xf32>, vector<8x64xf32> -> vector<8x64xf32>
    %29 = vector.extract_strided_slice %25 {offsets = [32, 0], sizes = [128, 64], strides = [1, 1]} : vector<192x64xf32> to vector<128x64xf32>
    %cst_27 = arith.constant dense<0.000000e+00> : vector<8x64xf32>
    %30 = tpu.matmul %14, %29, %cst_27 {dimension_numbers = #tpu.dot_dimension_numbers<[1], [0], [0], [1], [0, 0, 1, 1], [], []>} : vector<8x128xf32>, vector<128x64xf32>, vector<8x64xf32> -> vector<8x64xf32>
    %31 = arith.addf %28, %30 : vector<8x64xf32>
    %32 = vector.extract_strided_slice %25 {offsets = [160, 0], sizes = [16, 64], strides = [1, 1]} : vector<192x64xf32> to vector<16x64xf32>
    %cst_28 = arith.constant dense<0.000000e+00> : vector<8x64xf32>
    %33 = tpu.matmul %20, %32, %cst_28 {dimension_numbers = #tpu.dot_dimension_numbers<[1], [0], [0], [1], [0, 0, 1, 1], [], []>} : vector<8x16xf32>, vector<16x64xf32>, vector<8x64xf32> -> vector<8x64xf32>
    %34 = arith.addf %31, %33 : vector<8x64xf32>
    %35 = vector.extract_strided_slice %25 {offsets = [176, 0], sizes = [16, 64], strides = [1, 1]} : vector<192x64xf32> to vector<16x64xf32>
    %cst_29 = arith.constant dense<0.000000e+00> : vector<8x64xf32>
    %36 = tpu.matmul %24, %35, %cst_29 {dimension_numbers = #tpu.dot_dimension_numbers<[1], [0], [0], [1], [0, 0, 1, 1], [], []>} : vector<8x16xf32>, vector<16x64xf32>, vector<8x64xf32> -> vector<8x64xf32>
    %37 = arith.addf %34, %36 : vector<8x64xf32>
    %c0_30 = arith.constant 0 : index
    %c0_31 = arith.constant 0 : index
    %38 = vector.load %arg13[%c0_30, %c0_31] : memref<1x64xf32, #tpu.memory_space<vmem>>, vector<1x64xf32>
    %39 = vector.broadcast %38 : vector<1x64xf32> to vector<8x64xf32>
    %40 = arith.addf %37, %39 : vector<8x64xf32>
    %cst_32 = arith.constant 0.000000e+00 : f32
    %41 = vector.broadcast %cst_32 : f32 to vector<8x64xf32>
    %42 = arith.maximumf %40, %41 : vector<8x64xf32>
    %c0_33 = arith.constant 0 : index
    %c0_34 = arith.constant 0 : index
    %43 = vector.load %arg14[%c0_33, %c0_34] : memref<64x32xf32, #tpu.memory_space<vmem>>, vector<64x32xf32>
    %cst_35 = arith.constant dense<0.000000e+00> : vector<8x32xf32>
    %44 = tpu.matmul %42, %43, %cst_35 {dimension_numbers = #tpu.dot_dimension_numbers<[1], [0], [0], [1], [0, 0, 1, 1], [], []>} : vector<8x64xf32>, vector<64x32xf32>, vector<8x32xf32> -> vector<8x32xf32>
    %c0_36 = arith.constant 0 : index
    %c0_37 = arith.constant 0 : index
    %45 = vector.load %arg15[%c0_36, %c0_37] : memref<1x32xf32, #tpu.memory_space<vmem>>, vector<1x32xf32>
    %46 = vector.broadcast %45 : vector<1x32xf32> to vector<8x32xf32>
    %47 = arith.addf %44, %46 : vector<8x32xf32>
    %c0_38 = arith.constant 0 : index
    %c0_39 = arith.constant 0 : index
    %48 = vector.load %arg21[%c0_38, %c0_39] : memref<8x32xf32, #tpu.memory_space<vmem>>, vector<8x32xf32>
    tpu.vector_store %arg21[%c0_38, %c0_39], %47 {strides = array<i32>} : memref<8x32xf32, #tpu.memory_space<vmem>>, vector<8x32xf32>,
    %49 = vector.extract_strided_slice %47 {offsets = [0, 0], sizes = [8, 16], strides = [1, 1]} : vector<8x32xf32> to vector<8x16xf32>
    %50 = vector.extract_strided_slice %47 {offsets = [0, 16], sizes = [8, 16], strides = [1, 1]} : vector<8x32xf32> to vector<8x16xf32>
    %c0_40 = arith.constant 0 : index
    %c0_41 = arith.constant 0 : index
    %51 = vector.load %arg5[%c0_40, %c0_41] : memref<8x16xf32, #tpu.memory_space<vmem>>, vector<8x16xf32>
    %cst_42 = arith.constant 5.000000e-01 : f32
    %52 = vector.broadcast %cst_42 : f32 to vector<8x16xf32>
    %53 = arith.mulf %52, %50 : vector<8x16xf32>
    %54 = math.exp %53 : vector<8x16xf32>
    %55 = arith.mulf %51, %54 : vector<8x16xf32>
    %56 = arith.addf %49, %55 : vector<8x16xf32>
    %c0_43 = arith.constant 0 : index
    %c0_44 = arith.constant 0 : index
    %57 = vector.load %arg16[%c0_43, %c0_44] : memref<16x64xf32, #tpu.memory_space<vmem>>, vector<16x64xf32>
    %cst_45 = arith.constant dense<0.000000e+00> : vector<8x64xf32>
    %58 = tpu.matmul %56, %57, %cst_45 {dimension_numbers = #tpu.dot_dimension_numbers<[1], [0], [0], [1], [0, 0, 1, 1], [], []>} : vector<8x16xf32>, vector<16x64xf32>, vector<8x64xf32> -> vector<8x64xf32>
    %c0_46 = arith.constant 0 : index
    %c0_47 = arith.constant 0 : index
    %59 = vector.load %arg17[%c0_46, %c0_47] : memref<1x64xf32, #tpu.memory_space<vmem>>, vector<1x64xf32>
    %60 = vector.broadcast %59 : vector<1x64xf32> to vector<8x64xf32>
    %61 = arith.addf %58, %60 : vector<8x64xf32>
    %cst_48 = arith.constant 0.000000e+00 : f32
    %62 = vector.broadcast %cst_48 : f32 to vector<8x64xf32>
    %63 = arith.maximumf %61, %62 : vector<8x64xf32>
    %c0_49 = arith.constant 0 : index
    %c0_50 = arith.constant 0 : index
    %64 = vector.load %arg18[%c0_49, %c0_50] : memref<1x64xf32, #tpu.memory_space<vmem>>, vector<1x64xf32>
    %65 = vector.broadcast %64 : vector<1x64xf32> to vector<8x64xf32>
    %66 = arith.mulf %63, %65 : vector<8x64xf32>
    %cst_51 = arith.constant dense<0.000000e+00> : vector<8xf32>
    %67 = vector.multi_reduction <add>, %66, %cst_51 [1] : vector<8x64xf32> to vector<8xf32>
    %68 = vector.shape_cast %67 : vector<8xf32> to vector<8x1xf32>
    %c0_52 = arith.constant 0 : index
    %c0_53 = arith.constant 0 : index
    %69 = vector.load %arg19[%c0_52, %c0_53] : memref<1x1xf32, #tpu.memory_space<vmem>>, vector<1x1xf32>
    %70 = vector.broadcast %69 : vector<1x1xf32> to vector<8x1xf32>
    %71 = arith.addf %68, %70 : vector<8x1xf32>
    %c0_54 = arith.constant 0 : index
    %c0_55 = arith.constant 0 : index
    %72 = vector.load %arg20[%c0_54, %c0_55] : memref<8x1xf32, #tpu.memory_space<vmem>>, vector<8x1xf32>
    tpu.vector_store %arg20[%c0_54, %c0_55], %71 {strides = array<i32>} : memref<8x1xf32, #tpu.memory_space<vmem>>, vector<8x1xf32>,
    return
  }
  func.func @transform_0(%arg0: i32) -> (i32, i32) {
    %c0_i32 = arith.constant 0 : i32
    %c0_i32_0 = arith.constant 0 : i32
    return %arg0, %c0_i32 : i32, i32
  }
  func.func @transform_1(%arg0: i32) -> (i32, i32) {
    %c0_i32 = arith.constant 0 : i32
    %c0_i32_0 = arith.constant 0 : i32
    return %arg0, %c0_i32 : i32, i32
  }
  func.func @transform_2(%arg0: i32) -> (i32, i32) {
    %c0_i32 = arith.constant 0 : i32
    %c0_i32_0 = arith.constant 0 : i32
    return %arg0, %c0_i32 : i32, i32
  }
  func.func @transform_3(%arg0: i32) -> (i32, i32) {
    %c0_i32 = arith.constant 0 : i32
    %c0_i32_0 = arith.constant 0 : i32
    return %arg0, %c0_i32 : i32, i32
  }
  func.func @transform_4(%arg0: i32) -> (i32, i32) {
    %c0_i32 = arith.constant 0 : i32
    %c0_i32_0 = arith.constant 0 : i32
    return %arg0, %c0_i32 : i32, i32
  }
  func.func @transform_5(%arg0: i32) -> (i32, i32) {
    %c0_i32 = arith.constant 0 : i32
    %c0_i32_0 = arith.constant 0 : i32
    %c0_i32_1 = arith.constant 0 : i32
    return %c0_i32, %c0_i32_0 : i32, i32
  }
  func.func @transform_6(%arg0: i32) -> (i32, i32) {
    %c0_i32 = arith.constant 0 : i32
    %c0_i32_0 = arith.constant 0 : i32
    %c0_i32_1 = arith.constant 0 : i32
    return %c0_i32, %c0_i32_0 : i32, i32
  }
  func.func @transform_7(%arg0: i32) -> (i32, i32) {
    %c0_i32 = arith.constant 0 : i32
    %c0_i32_0 = arith.constant 0 : i32
    %c0_i32_1 = arith.constant 0 : i32
    return %c0_i32, %c0_i32_0 : i32, i32
  }
  func.func @transform_8(%arg0: i32) -> (i32, i32) {
    %c0_i32 = arith.constant 0 : i32
    %c0_i32_0 = arith.constant 0 : i32
    %c0_i32_1 = arith.constant 0 : i32
    return %c0_i32, %c0_i32_0 : i32, i32
  }
  func.func @transform_9(%arg0: i32) -> (i32, i32) {
    %c0_i32 = arith.constant 0 : i32
    %c0_i32_0 = arith.constant 0 : i32
    %c0_i32_1 = arith.constant 0 : i32
    return %c0_i32, %c0_i32_0 : i32, i32
  }
  func.func @transform_10(%arg0: i32) -> (i32, i32) {
    %c0_i32 = arith.constant 0 : i32
    %c0_i32_0 = arith.constant 0 : i32
    %c0_i32_1 = arith.constant 0 : i32
    return %c0_i32, %c0_i32_0 : i32, i32
  }
  func.func @transform_11(%arg0: i32) -> (i32, i32) {
    %c0_i32 = arith.constant 0 : i32
    %c0_i32_0 = arith.constant 0 : i32
    %c0_i32_1 = arith.constant 0 : i32
    return %c0_i32, %c0_i32_0 : i32, i32
  }
  func.func @transform_12(%arg0: i32) -> (i32, i32) {
    %c0_i32 = arith.constant 0 : i32
    %c0_i32_0 = arith.constant 0 : i32
    %c0_i32_1 = arith.constant 0 : i32
    return %c0_i32, %c0_i32_0 : i32, i32
  }
  func.func @transform_13(%arg0: i32) -> (i32, i32) {
    %c0_i32 = arith.constant 0 : i32
    %c0_i32_0 = arith.constant 0 : i32
    %c0_i32_1 = arith.constant 0 : i32
    return %c0_i32, %c0_i32_0 : i32, i32
  }
  func.func @transform_14(%arg0: i32) -> (i32, i32) {
    %c0_i32 = arith.constant 0 : i32
    %c0_i32_0 = arith.constant 0 : i32
    %c0_i32_1 = arith.constant 0 : i32
    return %c0_i32, %c0_i32_0 : i32, i32
  }
  func.func @transform_15(%arg0: i32) -> (i32, i32) {
    %c0_i32 = arith.constant 0 : i32
    %c0_i32_0 = arith.constant 0 : i32
    %c0_i32_1 = arith.constant 0 : i32
    return %c0_i32, %c0_i32_0 : i32, i32
  }
  func.func @transform_16(%arg0: i32) -> (i32, i32) {
    %c0_i32 = arith.constant 0 : i32
    %c0_i32_0 = arith.constant 0 : i32
    %c0_i32_1 = arith.constant 0 : i32
    return %c0_i32, %c0_i32_0 : i32, i32
  }
  func.func @transform_17(%arg0: i32) -> (i32, i32) {
    %c0_i32 = arith.constant 0 : i32
    %c0_i32_0 = arith.constant 0 : i32
    %c0_i32_1 = arith.constant 0 : i32
    return %c0_i32, %c0_i32_0 : i32, i32
  }
  func.func @transform_18(%arg0: i32) -> (i32, i32) {
    %c0_i32 = arith.constant 0 : i32
    %c0_i32_0 = arith.constant 0 : i32
    %c0_i32_1 = arith.constant 0 : i32
    return %c0_i32, %c0_i32_0 : i32, i32
  }
  func.func @transform_19(%arg0: i32) -> (i32, i32) {
    %c0_i32 = arith.constant 0 : i32
    %c0_i32_0 = arith.constant 0 : i32
    return %arg0, %c0_i32 : i32, i32
  }
  func.func @transform_20(%arg0: i32) -> (i32, i32) {
    %c0_i32 = arith.constant 0 : i32
    %c0_i32_0 = arith.constant 0 : i32
    return %arg0, %c0_i32 : i32, i32
  }
}

</mosaic_0001>

<llo_original>
// kernel: cvae_forward.1
$region0: #{cvae_forward.1}
  #allocation0 [shape = 'u32[]', space=smem, size = 0x4, offset = 0x4, fixed_abs, tag = 'smem constant byte address 0x4 - core index']
  #allocation1 [shape = 'u32[144,128]{1,0:T(1,128)}', space=vmem, size = 0x12000, scoped, tag = 'internal scratch']
  #allocation2 [shape = 'f32[1,1]{1,0:T(1,128)S(1)}', space=vmem, size = 0x200, scoped, tag = 'scoped memory for cvae_forward.1']
  %s0 = inlined_call_operand.vmem [shape: f32[8,32], index: 0, kind: input, shape index: {}]
  %s1 = inlined_call_operand.vmem [shape: f32[8,768], index: 1, kind: input, shape index: {}]
  %s2 = inlined_call_operand.vmem [shape: f32[8,32], index: 2, kind: input, shape index: {}]
  %s3 = inlined_call_operand.vmem [shape: f32[8,32], index: 3, kind: input, shape index: {}]
  %s4 = inlined_call_operand.vmem [shape: f32[8,16], index: 4, kind: input, shape index: {}]
  %s5 = inlined_call_operand.hbm [shape: f32[768,256], index: 5, kind: input, shape index: {}]
  %s6 = inlined_call_operand.vmem [shape: f32[1,256], index: 6, kind: input, shape index: {}]
  %s7 = inlined_call_operand.vmem [shape: f32[256,128], index: 7, kind: input, shape index: {}]
  %s8 = inlined_call_operand.vmem [shape: f32[1,128], index: 8, kind: input, shape index: {}]
  %s9 = inlined_call_operand.vmem [shape: f32[32,16], index: 9, kind: input, shape index: {}]
  %s10 = inlined_call_operand.vmem [shape: f32[1,16], index: 10, kind: input, shape index: {}]
  %s11 = inlined_call_operand.vmem [shape: f32[192,64], index: 11, kind: input, shape index: {}]
  %s12 = inlined_call_operand.vmem [shape: f32[1,64], index: 12, kind: input, shape index: {}]
  %s13 = inlined_call_operand.vmem [shape: f32[64,32], index: 13, kind: input, shape index: {}]
  %s14 = inlined_call_operand.vmem [shape: f32[1,32], index: 14, kind: input, shape index: {}]
  %s15 = inlined_call_operand.vmem [shape: f32[16,64], index: 15, kind: input, shape index: {}]
  %s16 = inlined_call_operand.vmem [shape: f32[1,64], index: 16, kind: input, shape index: {}]
  %s17 = inlined_call_operand.vmem [shape: f32[1,64], index: 17, kind: input, shape index: {}]
  %s18 = inlined_call_operand.<no memory space> [shape: f32[1,1], index: 18, kind: input, shape index: {}]
  %s19 = inlined_call_operand.vmem [shape: f32[8,1], index: 19, kind: output, shape index: {0}]
  %s20 = inlined_call_operand.vmem [shape: f32[8,32], index: 20, kind: output, shape index: {1}]
  %21 = xla_tuple %s19, %s20
  %s22 = sld [smem:[#allocation0]]
  $region98: #{cvae_forward.1} parent=0
    _
  %s24 = ssub.s32 1, %s22
  %s25 = scalar_select 0, %s24, %s22
  %v26 = vstv %s18
  %27 = vst [vmem:[#allocation2] sm:$0x1] %v26
  $region1: #{cvae_forward.1} parent=0
    #allocation3 [shape = 'u8[786432]{0}', space=vmem, size = 0xc0000, scoped, tag = 'input window, operand 5, single buffered']
    #allocation4 [shape = 's32[1]{0}', space=sflag, size = 0x4, scoped, tag = 'scoped memory for cvae_forward.1']
    %28 = vsyncpa [#allocation4], 0
    // Predicated region
    $region2: #{cvae_forward.1} parent=1 // pred_check
      _
    $region3: #{cvae_forward.1} parent=1 // pred_check_branch
      %30 = sbr.rel (0) target = $region5
    $region4: #{cvae_forward.1} parent=1 // pred_region
      _
    $region5: #{cvae_forward.1} parent=1 // pred_fallthru
      _
    // Predicated region
    $region6: #{cvae_forward.1} parent=1 // pred_check
      _
    $region7: #{cvae_forward.1} parent=1 // pred_check_branch
      %32 = sbr.rel (0) target = $region9
    $region8: #{cvae_forward.1} parent=1 // pred_region
      _
    $region9: #{cvae_forward.1} parent=1 // pred_fallthru
      _
    // Predicated region
    $region10: #{cvae_forward.1} parent=1 // pred_check
      _
    $region11: #{cvae_forward.1} parent=1 // pred_check_branch
      %34 = sbr.rel (0) target = $region13
    $region12: #{cvae_forward.1} parent=1 // pred_region
      _
    $region13: #{cvae_forward.1} parent=1 // pred_fallthru
      _
    // Predicated region
    $region14: #{cvae_forward.1} parent=1 // pred_check
      _
    $region15: #{cvae_forward.1} parent=1 // pred_check_branch
      %36 = sbr.rel (0) target = $region17
    $region16: #{cvae_forward.1} parent=1 // pred_region
      _
    $region17: #{cvae_forward.1} parent=1 // pred_fallthru
      _
    // Predicated region
    $region18: #{cvae_forward.1} parent=1 // pred_check
      _
    $region19: #{cvae_forward.1} parent=1 // pred_check_branch
      %38 = sbr.rel (0) target = $region21
    $region20: #{cvae_forward.1} parent=1 // pred_region
      _
    $region21: #{cvae_forward.1} parent=1 // pred_fallthru
      _
    // Predicated region
    $region22: #{cvae_forward.1} parent=1 // pred_check
      _
    $region23: #{cvae_forward.1} parent=1 // pred_check_branch
      %40 = sbr.rel (0) target = $region25
    $region24: #{cvae_forward.1} parent=1 // pred_region
      %s42 = ssub.s32 24576, 24576
      %43 = vsyncadd [#allocation4], %s42
      %s44 = sshll.u32 [#allocation3], 4
      %s45 = int_to_ptr.vmem [resolvable:$true] %s44
      %50 = dma.hbm_to_vmem [thread:$0]  %s5, 24576, %s45, [#allocation4], 256, 256, 16
    $region25: #{cvae_forward.1} parent=1 // pred_fallthru
      _
    // Predicated region
    $region26: #{cvae_forward.1} parent=1 // pred_check
      _
    $region27: #{cvae_forward.1} parent=1 // pred_check_branch
      %52 = sbr.rel (0) target = $region29
    $region28: #{cvae_forward.1} parent=1 // pred_region
      _
    $region29: #{cvae_forward.1} parent=1 // pred_fallthru
      _
    // Predicated region
    $region30: #{cvae_forward.1} parent=1 // pred_check
      _
    $region31: #{cvae_forward.1} parent=1 // pred_check_branch
      %54 = sbr.rel (0) target = $region33
    $region32: #{cvae_forward.1} parent=1 // pred_region
      _
    $region33: #{cvae_forward.1} parent=1 // pred_fallthru
      _
    // Predicated region
    $region34: #{cvae_forward.1} parent=1 // pred_check
      _
    $region35: #{cvae_forward.1} parent=1 // pred_check_branch
      %56 = sbr.rel (0) target = $region37
    $region36: #{cvae_forward.1} parent=1 // pred_region
      _
    $region37: #{cvae_forward.1} parent=1 // pred_fallthru
      _
    // Predicated region
    $region38: #{cvae_forward.1} parent=1 // pred_check
      _
    $region39: #{cvae_forward.1} parent=1 // pred_check_branch
      %58 = sbr.rel (0) target = $region41
    $region40: #{cvae_forward.1} parent=1 // pred_region
      _
    $region41: #{cvae_forward.1} parent=1 // pred_fallthru
      _
    // Predicated region
    $region42: #{cvae_forward.1} parent=1 // pred_check
      _
    $region43: #{cvae_forward.1} parent=1 // pred_check_branch
      %60 = sbr.rel (0) target = $region45
    $region44: #{cvae_forward.1} parent=1 // pred_region
      _
    $region45: #{cvae_forward.1} parent=1 // pred_fallthru
      _
    // Predicated region
    $region46: #{cvae_forward.1} parent=1 // pred_check
      _
    $region47: #{cvae_forward.1} parent=1 // pred_check_branch
      %62 = sbr.rel (0) target = $region49
    $region48: #{cvae_forward.1} parent=1 // pred_region
      _
    $region49: #{cvae_forward.1} parent=1 // pred_fallthru
      _
    // Predicated region
    $region50: #{cvae_forward.1} parent=1 // pred_check
      _
    $region51: #{cvae_forward.1} parent=1 // pred_check_branch
      %64 = sbr.rel (0) target = $region53
    $region52: #{cvae_forward.1} parent=1 // pred_region
      _
    $region53: #{cvae_forward.1} parent=1 // pred_fallthru
      _
    // Predicated region
    $region54: #{cvae_forward.1} parent=1 // pred_check
      _
    $region55: #{cvae_forward.1} parent=1 // pred_check_branch
      %66 = sbr.rel (0) target = $region57
    $region56: #{cvae_forward.1} parent=1 // pred_region
      _
    $region57: #{cvae_forward.1} parent=1 // pred_fallthru
      _
    // Predicated region
    $region58: #{cvae_forward.1} parent=1 // pred_check
      _
    $region59: #{cvae_forward.1} parent=1 // pred_check_branch
      %68 = sbr.rel (0) target = $region61
    $region60: #{cvae_forward.1} parent=1 // pred_region
      _
    $region61: #{cvae_forward.1} parent=1 // pred_fallthru
      _
    // Predicated region
    $region62: #{cvae_forward.1} parent=1 // pred_check
      _
    $region63: #{cvae_forward.1} parent=1 // pred_check_branch
      %70 = sbr.rel (0) target = $region65
    $region64: #{cvae_forward.1} parent=1 // pred_region
      _
    $region65: #{cvae_forward.1} parent=1 // pred_fallthru
      _
    // Predicated region
    $region66: #{cvae_forward.1} parent=1 // pred_check
      _
    $region67: #{cvae_forward.1} parent=1 // pred_check_branch
      %72 = sbr.rel (0) target = $region69
    $region68: #{cvae_forward.1} parent=1 // pred_region
      _
    $region69: #{cvae_forward.1} parent=1 // pred_fallthru
      _
    // Predicated region
    $region70: #{cvae_forward.1} parent=1 // pred_check
      _
    $region71: #{cvae_forward.1} parent=1 // pred_check_branch
      %74 = sbr.rel (0) target = $region73
    $region72: #{cvae_forward.1} parent=1 // pred_region
      _
    $region73: #{cvae_forward.1} parent=1 // pred_fallthru
      _
    // Predicated region
    $region74: #{cvae_forward.1} parent=1 // pred_check
      _
    $region75: #{cvae_forward.1} parent=1 // pred_check_branch
      %76 = sbr.rel (0) target = $region77
    $region76: #{cvae_forward.1} parent=1 // pred_region
      _
    $region77: #{cvae_forward.1} parent=1 // pred_fallthru
      _
    // Predicated region
    $region78: #{cvae_forward.1} parent=1 // pred_check
      _
    $region79: #{cvae_forward.1} parent=1 // pred_check_branch
      %78 = sbr.rel (0) target = $region81
    $region80: #{cvae_forward.1} parent=1 // pred_region
      %79 = dma.done [#allocation4], 24576
    $region81: #{cvae_forward.1} parent=1 // pred_fallthru
      _
    %v80 = vld [vmem:[%s1] sm:$0xff]
    %v81 = vld [vmem:[%s1 + $0x8] sm:$0xff]
    %v82 = vld [vmem:[%s1 + $0x10] sm:$0xff]
    %v83 = vld [vmem:[%s1 + $0x18] sm:$0xff]
    %v84 = vld [vmem:[%s1 + $0x20] sm:$0xff]
    %v85 = vld [vmem:[%s1 + $0x28] sm:$0xff]
    %v86 = vld [vmem:[#allocation3] sm:$0xff]
    %v87 = vld [vmem:[#allocation3 + $0x8] sm:$0xff]
    %v88 = vld [vmem:[#allocation3 + $0x10] sm:$0xff]
    %v89 = vld [vmem:[#allocation3 + $0x18] sm:$0xff]
    %v90 = vld [vmem:[#allocation3 + $0x20] sm:$0xff]
    %v91 = vld [vmem:[#allocation3 + $0x28] sm:$0xff]
    %v92 = vld [vmem:[#allocation3 + $0x30] sm:$0xff]
    %v93 = vld [vmem:[#allocation3 + $0x38] sm:$0xff]
    %v94 = vld [vmem:[#allocation3 + $0x40] sm:$0xff]
    %v95 = vld [vmem:[#allocation3 + $0x48] sm:$0xff]
    %v96 = vld [vmem:[#allocation3 + $0x50] sm:$0xff]
    %v97 = vld [vmem:[#allocation3 + $0x58] sm:$0xff]
    %v98 = vld [vmem:[#allocation3 + $0x60] sm:$0xff]
    %v99 = vld [vmem:[#allocation3 + $0x68] sm:$0xff]
    %v100 = vld [vmem:[#allocation3 + $0x70] sm:$0xff]
    %v101 = vld [vmem:[#allocation3 + $0x78] sm:$0xff]
    %v102 = vld [vmem:[#allocation3 + $0x80] sm:$0xff]
    %v103 = vld [vmem:[#allocation3 + $0x88] sm:$0xff]
    %v104 = vld [vmem:[#allocation3 + $0x90] sm:$0xff]
    %v105 = vld [vmem:[#allocation3 + $0x98] sm:$0xff]
    %v106 = vld [vmem:[#allocation3 + $0xa0] sm:$0xff]
    %v107 = vld [vmem:[#allocation3 + $0xa8] sm:$0xff]
    %v108 = vld [vmem:[#allocation3 + $0xb0] sm:$0xff]
    %v109 = vld [vmem:[#allocation3 + $0xb8] sm:$0xff]
    %v110 = vld [vmem:[#allocation3 + $0xc0] sm:$0xff]
    %v111 = vld [vmem:[#allocation3 + $0xc8] sm:$0xff]
    %v112 = vld [vmem:[#allocation3 + $0xd0] sm:$0xff]
    %v113 = vld [vmem:[#allocation3 + $0xd8] sm:$0xff]
    %v114 = vld [vmem:[#allocation3 + $0xe0] sm:$0xff]
    %v115 = vld [vmem:[#allocation3 + $0xe8] sm:$0xff]
    %v116 = vld [vmem:[#allocation3 + $0xf0] sm:$0xff]
    %v117 = vld [vmem:[#allocation3 + $0xf8] sm:$0xff]
    %v118 = vld [vmem:[#allocation3 + $0x100] sm:$0xff]
    %v119 = vld [vmem:[#allocation3 + $0x108] sm:$0xff]
    %v120 = vld [vmem:[#allocation3 + $0x110] sm:$0xff]
    %v121 = vld [vmem:[#allocation3 + $0x118] sm:$0xff]
    %v122 = vld [vmem:[#allocation3 + $0x120] sm:$0xff]
    %v123 = vld [vmem:[#allocation3 + $0x128] sm:$0xff]
    %v124 = vld [vmem:[#allocation3 + $0x130] sm:$0xff]
    %v125 = vld [vmem:[#allocation3 + $0x138] sm:$0xff]
    %v126 = vld [vmem:[#allocation3 + $0x140] sm:$0xff]
    %v127 = vld [vmem:[#allocation3 + $0x148] sm:$0xff]
    %v128 = vld [vmem:[#allocation3 + $0x150] sm:$0xff]
    %v129 = vld [vmem:[#allocation3 + $0x158] sm:$0xff]
    %v130 = vld [vmem:[#allocation3 + $0x160] sm:$0xff]
    %v131 = vld [vmem:[#allocation3 + $0x168] sm:$0xff]
    %v132 = vld [vmem:[#allocation3 + $0x170] sm:$0xff]
    %v133 = vld [vmem:[#allocation3 + $0x178] sm:$0xff]
    %v134 = vld [vmem:[#allocation3 + $0x180] sm:$0xff]
    %v135 = vld [vmem:[#allocation3 + $0x188] sm:$0xff]
    %v136 = vld [vmem:[#allocation3 + $0x190] sm:$0xff]
    %v137 = vld [vmem:[#allocation3 + $0x198] sm:$0xff]
    %v138 = vld [vmem:[#allocation3 + $0x1a0] sm:$0xff]
    %v139 = vld [vmem:[#allocation3 + $0x1a8] sm:$0xff]
    %v140 = vld [vmem:[#allocation3 + $0x1b0] sm:$0xff]
    %v141 = vld [vmem:[#allocation3 + $0x1b8] sm:$0xff]
    %v142 = vld [vmem:[#allocation3 + $0x1c0] sm:$0xff]
    %v143 = vld [vmem:[#allocation3 + $0x1c8] sm:$0xff]
    %v144 = vld [vmem:[#allocation3 + $0x1d0] sm:$0xff]
    %v145 = vld [vmem:[#allocation3 + $0x1d8] sm:$0xff]
    %v146 = vld [vmem:[#allocation3 + $0x1e0] sm:$0xff]
    %v147 = vld [vmem:[#allocation3 + $0x1e8] sm:$0xff]
    %v148 = vld [vmem:[#allocation3 + $0x1f0] sm:$0xff]
    %v149 = vld [vmem:[#allocation3 + $0x1f8] sm:$0xff]
    %v150 = vld [vmem:[#allocation3 + $0x200] sm:$0xff]
    %v151 = vld [vmem:[#allocation3 + $0x208] sm:$0xff]
    %v152 = vld [vmem:[#allocation3 + $0x210] sm:$0xff]
    %v153 = vld [vmem:[#allocation3 + $0x218] sm:$0xff]
    %v154 = vld [vmem:[#allocation3 + $0x220] sm:$0xff]
    %v155 = vld [vmem:[#allocation3 + $0x228] sm:$0xff]
    %v156 = vld [vmem:[#allocation3 + $0x230] sm:$0xff]
    %v157 = vld [vmem:[#allocation3 + $0x238] sm:$0xff]
    %v158 = vld [vmem:[#allocation3 + $0x240] sm:$0xff]
    %v159 = vld [vmem:[#allocation3 + $0x248] sm:$0xff]
    %v160 = vld [vmem:[#allocation3 + $0x250] sm:$0xff]
    %v161 = vld [vmem:[#allocation3 + $0x258] sm:$0xff]
    %v162 = vld [vmem:[#allocation3 + $0x260] sm:$0xff]
    %v163 = vld [vmem:[#allocation3 + $0x268] sm:$0xff]
    %v164 = vld [vmem:[#allocation3 + $0x270] sm:$0xff]
    %v165 = vld [vmem:[#allocation3 + $0x278] sm:$0xff]
    %v166 = vld [vmem:[#allocation3 + $0x280] sm:$0xff]
    %v167 = vld [vmem:[#allocation3 + $0x288] sm:$0xff]
    %v168 = vld [vmem:[#allocation3 + $0x290] sm:$0xff]
    %v169 = vld [vmem:[#allocation3 + $0x298] sm:$0xff]
    %v170 = vld [vmem:[#allocation3 + $0x2a0] sm:$0xff]
    %v171 = vld [vmem:[#allocation3 + $0x2a8] sm:$0xff]
    %v172 = vld [vmem:[#allocation3 + $0x2b0] sm:$0xff]
    %v173 = vld [vmem:[#allocation3 + $0x2b8] sm:$0xff]
    %v174 = vld [vmem:[#allocation3 + $0x2c0] sm:$0xff]
    %v175 = vld [vmem:[#allocation3 + $0x2c8] sm:$0xff]
    %v176 = vld [vmem:[#allocation3 + $0x2d0] sm:$0xff]
    %v177 = vld [vmem:[#allocation3 + $0x2d8] sm:$0xff]
    %v178 = vld [vmem:[#allocation3 + $0x2e0] sm:$0xff]
    %v179 = vld [vmem:[#allocation3 + $0x2e8] sm:$0xff]
    %v180 = vld [vmem:[#allocation3 + $0x2f0] sm:$0xff]
    %v181 = vld [vmem:[#allocation3 + $0x2f8] sm:$0xff]
    %v182 = vld [vmem:[#allocation3 + $0x300] sm:$0xff]
    %v183 = vld [vmem:[#allocation3 + $0x308] sm:$0xff]
    %v184 = vld [vmem:[#allocation3 + $0x310] sm:$0xff]
    %v185 = vld [vmem:[#allocation3 + $0x318] sm:$0xff]
    %v186 = vld [vmem:[#allocation3 + $0x320] sm:$0xff]
    %v187 = vld [vmem:[#allocation3 + $0x328] sm:$0xff]
    %v188 = vld [vmem:[#allocation3 + $0x330] sm:$0xff]
    %v189 = vld [vmem:[#allocation3 + $0x338] sm:$0xff]
    %v190 = vld [vmem:[#allocation3 + $0x340] sm:$0xff]
    %v191 = vld [vmem:[#allocation3 + $0x348] sm:$0xff]
    %v192 = vld [vmem:[#allocation3 + $0x350] sm:$0xff]
    %v193 = vld [vmem:[#allocation3 + $0x358] sm:$0xff]
    %v194 = vld [vmem:[#allocation3 + $0x360] sm:$0xff]
    %v195 = vld [vmem:[#allocation3 + $0x368] sm:$0xff]
    %v196 = vld [vmem:[#allocation3 + $0x370] sm:$0xff]
    %v197 = vld [vmem:[#allocation3 + $0x378] sm:$0xff]
    %v198 = vld [vmem:[#allocation3 + $0x380] sm:$0xff]
    %v199 = vld [vmem:[#allocation3 + $0x388] sm:$0xff]
    %v200 = vld [vmem:[#allocation3 + $0x390] sm:$0xff]
    %v201 = vld [vmem:[#allocation3 + $0x398] sm:$0xff]
    %v202 = vld [vmem:[#allocation3 + $0x3a0] sm:$0xff]
    %v203 = vld [vmem:[#allocation3 + $0x3a8] sm:$0xff]
    %v204 = vld [vmem:[#allocation3 + $0x3b0] sm:$0xff]
    %v205 = vld [vmem:[#allocation3 + $0x3b8] sm:$0xff]
    %v206 = vld [vmem:[#allocation3 + $0x3c0] sm:$0xff]
    %v207 = vld [vmem:[#allocation3 + $0x3c8] sm:$0xff]
    %v208 = vld [vmem:[#allocation3 + $0x3d0] sm:$0xff]
    %v209 = vld [vmem:[#allocation3 + $0x3d8] sm:$0xff]
    %v210 = vld [vmem:[#allocation3 + $0x3e0] sm:$0xff]
    %v211 = vld [vmem:[#allocation3 + $0x3e8] sm:$0xff]
    %v212 = vld [vmem:[#allocation3 + $0x3f0] sm:$0xff]
    %v213 = vld [vmem:[#allocation3 + $0x3f8] sm:$0xff]
    %v214 = vld [vmem:[#allocation3 + $0x400] sm:$0xff]
    %v215 = vld [vmem:[#allocation3 + $0x408] sm:$0xff]
    %v216 = vld [vmem:[#allocation3 + $0x410] sm:$0xff]
    %v217 = vld [vmem:[#allocation3 + $0x418] sm:$0xff]
    %v218 = vld [vmem:[#allocation3 + $0x420] sm:$0xff]
    %v219 = vld [vmem:[#allocation3 + $0x428] sm:$0xff]
    %v220 = vld [vmem:[#allocation3 + $0x430] sm:$0xff]
    %v221 = vld [vmem:[#allocation3 + $0x438] sm:$0xff]
    %v222 = vld [vmem:[#allocation3 + $0x440] sm:$0xff]
    %v223 = vld [vmem:[#allocation3 + $0x448] sm:$0xff]
    %v224 = vld [vmem:[#allocation3 + $0x450] sm:$0xff]
    %v225 = vld [vmem:[#allocation3 + $0x458] sm:$0xff]
    %v226 = vld [vmem:[#allocation3 + $0x460] sm:$0xff]
    %v227 = vld [vmem:[#allocation3 + $0x468] sm:$0xff]
    %v228 = vld [vmem:[#allocation3 + $0x470] sm:$0xff]
    %v229 = vld [vmem:[#allocation3 + $0x478] sm:$0xff]
    %v230 = vld [vmem:[#allocation3 + $0x480] sm:$0xff]
    %v231 = vld [vmem:[#allocation3 + $0x488] sm:$0xff]
    %v232 = vld [vmem:[#allocation3 + $0x490] sm:$0xff]
    %v233 = vld [vmem:[#allocation3 + $0x498] sm:$0xff]
    %v234 = vld [vmem:[#allocation3 + $0x4a0] sm:$0xff]
    %v235 = vld [vmem:[#allocation3 + $0x4a8] sm:$0xff]
    %v236 = vld [vmem:[#allocation3 + $0x4b0] sm:$0xff]
    %v237 = vld [vmem:[#allocation3 + $0x4b8] sm:$0xff]
    %v238 = vld [vmem:[#allocation3 + $0x4c0] sm:$0xff]
    %v239 = vld [vmem:[#allocation3 + $0x4c8] sm:$0xff]
    %v240 = vld [vmem:[#allocation3 + $0x4d0] sm:$0xff]
    %v241 = vld [vmem:[#allocation3 + $0x4d8] sm:$0xff]
    %v242 = vld [vmem:[#allocation3 + $0x4e0] sm:$0xff]
    %v243 = vld [vmem:[#allocation3 + $0x4e8] sm:$0xff]
    %v244 = vld [vmem:[#allocation3 + $0x4f0] sm:$0xff]
    %v245 = vld [vmem:[#allocation3 + $0x4f8] sm:$0xff]
    %v246 = vld [vmem:[#allocation3 + $0x500] sm:$0xff]
    %v247 = vld [vmem:[#allocation3 + $0x508] sm:$0xff]
    %v248 = vld [vmem:[#allocation3 + $0x510] sm:$0xff]
    %v249 = vld [vmem:[#allocation3 + $0x518] sm:$0xff]
    %v250 = vld [vmem:[#allocation3 + $0x520] sm:$0xff]
    %v251 = vld [vmem:[#allocation3 + $0x528] sm:$0xff]
    %v252 = vld [vmem:[#allocation3 + $0x530] sm:$0xff]
    %v253 = vld [vmem:[#allocation3 + $0x538] sm:$0xff]
    %v254 = vld [vmem:[#allocation3 + $0x540] sm:$0xff]
    %v255 = vld [vmem:[#allocation3 + $0x548] sm:$0xff]
    %v256 = vld [vmem:[#allocation3 + $0x550] sm:$0xff]
    %v257 = vld [vmem:[#allocation3 + $0x558] sm:$0xff]
    %v258 = vld [vmem:[#allocation3 + $0x560] sm:$0xff]
    %v259 = vld [vmem:[#allocation3 + $0x568] sm:$0xff]
    %v260 = vld [vmem:[#allocation3 + $0x570] sm:$0xff]
    %v261 = vld [vmem:[#allocation3 + $0x578] sm:$0xff]
    %v262 = vld [vmem:[#allocation3 + $0x580] sm:$0xff]
    %v263 = vld [vmem:[#allocation3 + $0x588] sm:$0xff]
    %v264 = vld [vmem:[#allocation3 + $0x590] sm:$0xff]
    %v265 = vld [vmem:[#allocation3 + $0x598] sm:$0xff]
    %v266 = vld [vmem:[#allocation3 + $0x5a0] sm:$0xff]
    %v267 = vld [vmem:[#allocation3 + $0x5a8] sm:$0xff]
    %v268 = vld [vmem:[#allocation3 + $0x5b0] sm:$0xff]
    %v269 = vld [vmem:[#allocation3 + $0x5b8] sm:$0xff]
    %v270 = vld [vmem:[#allocation3 + $0x5c0] sm:$0xff]
    %v271 = vld [vmem:[#allocation3 + $0x5c8] sm:$0xff]
    %v272 = vld [vmem:[#allocation3 + $0x5d0] sm:$0xff]
    %v273 = vld [vmem:[#allocation3 + $0x5d8] sm:$0xff]
    %v274 = vld [vmem:[#allocation3 + $0x5e0] sm:$0xff]
    %v275 = vld [vmem:[#allocation3 + $0x5e8] sm:$0xff]
    %v276 = vld [vmem:[#allocation3 + $0x5f0] sm:$0xff]
    %v277 = vld [vmem:[#allocation3 + $0x5f8] sm:$0xff]
    %v278 = vld [vmem:[%s6] sm:$0x3]
    %v280 = vlaneseq
    %v281 = vshrl.u32 %v280, 7
    %v282 = vsub.s32 0, %v281
    %v283 = vrot.slane %v278, %v282
    %v284 = vlaneseq
    %v285 = vshrl.u32 %v284, 7
    %v286 = vsub.s32 1, %v285
    %v287 = vrot.slane %v278, %v286
    %290 = vmatprep.subr.mxu0 %v117
    %291 = vmatpush1.msra.mxu0 %v116
    %292 = vmatprep.subr.mxu0 %v115
    %293 = vmatpush1.msra.mxu0 %v114
    %294 = vmatprep.subr.mxu0 %v113
    %295 = vmatpush1.msra.mxu0 %v112
    %296 = vmatprep.subr.mxu0 %v111
    %297 = vmatpush1.msra.mxu0 %v110
    %298 = vmatprep.subr.mxu0 %v109
    %299 = vmatpush1.msra.mxu0 %v108
    %300 = vmatprep.subr.mxu0 %v107
    %301 = vmatpush1.msra.mxu0 %v106
    %302 = vmatprep.subr.mxu0 %v105
    %303 = vmatpush1.msra.mxu0 %v104
    %304 = vmatprep.subr.mxu0 %v103
    %305 = vmatpush1.msra.mxu0 %v102
    %306 = vmatprep.subr.mxu0 %v101
    %307 = vmatpush1.msra.mxu0 %v100
    %308 = vmatprep.subr.mxu0 %v99
    %309 = vmatpush1.msra.mxu0 %v98
    %310 = vmatprep.subr.mxu0 %v97
    %311 = vmatpush1.msra.mxu0 %v96
    %312 = vmatprep.subr.mxu0 %v95
    %313 = vmatpush1.msra.mxu0 %v94
    %314 = vmatprep.subr.mxu0 %v93
    %315 = vmatpush1.msra.mxu0 %v92
    %316 = vmatprep.subr.mxu0 %v91
    %317 = vmatpush1.msra.mxu0 %v90
    %318 = vmatprep.subr.mxu0 %v89
    %319 = vmatpush1.msra.mxu0 %v88
    %320 = vmatprep.subr.mxu0 %v87
    %321 = vmatpush1.msra.mxu0 %v86
    %322 = vmatprep.subr.mxu0 %v149
    %323 = vmatpush2.msra.mxu0 %v148
    %324 = vmatprep.subr.mxu0 %v147
    %325 = vmatpush2.msra.mxu0 %v146
    %326 = vmatprep.subr.mxu0 %v145
    %327 = vmatpush2.msra.mxu0 %v144
    %328 = vmatprep.subr.mxu0 %v143
    %329 = vmatpush2.msra.mxu0 %v142
    %330 = vmatprep.subr.mxu0 %v141
    %331 = vmatpush2.msra.mxu0 %v140
    %332 = vmatprep.subr.mxu0 %v139
    %333 = vmatpush2.msra.mxu0 %v138
    %334 = vmatprep.subr.mxu0 %v137
    %335 = vmatpush2.msra.mxu0 %v136
    %336 = vmatprep.subr.mxu0 %v135
    %337 = vmatpush2.msra.mxu0 %v134
    %338 = vmatprep.subr.mxu0 %v133
    %339 = vmatpush2.msra.mxu0 %v132
    %340 = vmatprep.subr.mxu0 %v131
    %341 = vmatpush2.msra.mxu0 %v130
    %342 = vmatprep.subr.mxu0 %v129
    %343 = vmatpush2.msra.mxu0 %v128
    %344 = vmatprep.subr.mxu0 %v127
    %345 = vmatpush2.msra.mxu0 %v126
    %346 = vmatprep.subr.mxu0 %v125
    %347 = vmatpush2.msra.mxu0 %v124
    %348 = vmatprep.subr.mxu0 %v123
    %349 = vmatpush2.msra.mxu0 %v122
    %350 = vmatprep.subr.mxu0 %v121
    %351 = vmatpush2.msra.mxu0 %v120
    %352 = vmatprep.subr.mxu0 %v119
    %353 = vmatpush2.msra.mxu0 %v118
    %354 = vmatprep.mubr.f32.mxu0 %v81
    %355 = vmatmul.mubr.f32.gmra.mxu0 %v80
    %v356 = vpop.f32.mrf.mxu0
    %v357 = vadd.f32 %v283, %v356
    %v358 = vpop.f32.mrf.mxu0
    %v359 = vadd.f32 %v287, %v358
    %360 = vdwg.mxu0
    %361 = vmatprep.subr.mxu0 %v181
    %362 = vmatpush1.msra.mxu0 %v180
    %363 = vmatprep.subr.mxu0 %v179
    %364 = vmatpush1.msra.mxu0 %v178
    %365 = vmatprep.subr.mxu0 %v177
    %366 = vmatpush1.msra.mxu0 %v176
    %367 = vmatprep.subr.mxu0 %v175
    %368 = vmatpush1.msra.mxu0 %v174
    %369 = vmatprep.subr.mxu0 %v173
    %370 = vmatpush1.msra.mxu0 %v172
    %371 = vmatprep.subr.mxu0 %v171
    %372 = vmatpush1.msra.mxu0 %v170
    %373 = vmatprep.subr.mxu0 %v169
    %374 = vmatpush1.msra.mxu0 %v168
    %375 = vmatprep.subr.mxu0 %v167
    %376 = vmatpush1.msra.mxu0 %v166
    %377 = vmatprep.subr.mxu0 %v165
    %378 = vmatpush1.msra.mxu0 %v164
    %379 = vmatprep.subr.mxu0 %v163
    %380 = vmatpush1.msra.mxu0 %v162
    %381 = vmatprep.subr.mxu0 %v161
    %382 = vmatpush1.msra.mxu0 %v160
    %383 = vmatprep.subr.mxu0 %v159
    %384 = vmatpush1.msra.mxu0 %v158
    %385 = vmatprep.subr.mxu0 %v157
    %386 = vmatpush1.msra.mxu0 %v156
    %387 = vmatprep.subr.mxu0 %v155
    %388 = vmatpush1.msra.mxu0 %v154
    %389 = vmatprep.subr.mxu0 %v153
    %390 = vmatpush1.msra.mxu0 %v152
    %391 = vmatprep.subr.mxu0 %v151
    %392 = vmatpush1.msra.mxu0 %v150
    %393 = vmatprep.subr.mxu0 %v213
    %394 = vmatpush2.msra.mxu0 %v212
    %395 = vmatprep.subr.mxu0 %v211
    %396 = vmatpush2.msra.mxu0 %v210
    %397 = vmatprep.subr.mxu0 %v209
    %398 = vmatpush2.msra.mxu0 %v208
    %399 = vmatprep.subr.mxu0 %v207
    %400 = vmatpush2.msra.mxu0 %v206
    %401 = vmatprep.subr.mxu0 %v205
    %402 = vmatpush2.msra.mxu0 %v204
    %403 = vmatprep.subr.mxu0 %v203
    %404 = vmatpush2.msra.mxu0 %v202
    %405 = vmatprep.subr.mxu0 %v201
    %406 = vmatpush2.msra.mxu0 %v200
    %407 = vmatprep.subr.mxu0 %v199
    %408 = vmatpush2.msra.mxu0 %v198
    %409 = vmatprep.subr.mxu0 %v197
    %410 = vmatpush2.msra.mxu0 %v196
    %411 = vmatprep.subr.mxu0 %v195
    %412 = vmatpush2.msra.mxu0 %v194
    %413 = vmatprep.subr.mxu0 %v193
    %414 = vmatpush2.msra.mxu0 %v192
    %415 = vmatprep.subr.mxu0 %v191
    %416 = vmatpush2.msra.mxu0 %v190
    %417 = vmatprep.subr.mxu0 %v189
    %418 = vmatpush2.msra.mxu0 %v188
    %419 = vmatprep.subr.mxu0 %v187
    %420 = vmatpush2.msra.mxu0 %v186
    %421 = vmatprep.subr.mxu0 %v185
    %422 = vmatpush2.msra.mxu0 %v184
    %423 = vmatprep.subr.mxu0 %v183
    %424 = vmatpush2.msra.mxu0 %v182
    %425 = vmatprep.mubr.f32.mxu0 %v83
    %426 = vmatmul.mubr.f32.gmra.mxu0 %v82
    %v427 = vpop.f32.mrf.mxu0
    %v428 = vadd.f32 %v357, %v427
    %v429 = vpop.f32.mrf.mxu0
    %v430 = vadd.f32 %v359, %v429
    %431 = vdwg.mxu0
    %432 = vmatprep.subr.mxu0 %v245
    %433 = vmatpush1.msra.mxu0 %v244
    %434 = vmatprep.subr.mxu0 %v243
    %435 = vmatpush1.msra.mxu0 %v242
    %436 = vmatprep.subr.mxu0 %v241
    %437 = vmatpush1.msra.mxu0 %v240
    %438 = vmatprep.subr.mxu0 %v239
    %439 = vmatpush1.msra.mxu0 %v238
    %440 = vmatprep.subr.mxu0 %v237
    %441 = vmatpush1.msra.mxu0 %v236
    %442 = vmatprep.subr.mxu0 %v235
    %443 = vmatpush1.msra.mxu0 %v234
    %444 = vmatprep.subr.mxu0 %v233
    %445 = vmatpush1.msra.mxu0 %v232
    %446 = vmatprep.subr.mxu0 %v231
    %447 = vmatpush1.msra.mxu0 %v230
    %448 = vmatprep.subr.mxu0 %v229
    %449 = vmatpush1.msra.mxu0 %v228
    %450 = vmatprep.subr.mxu0 %v227
    %451 = vmatpush1.msra.mxu0 %v226
    %452 = vmatprep.subr.mxu0 %v225
    %453 = vmatpush1.msra.mxu0 %v224
    %454 = vmatprep.subr.mxu0 %v223
    %455 = vmatpush1.msra.mxu0 %v222
    %456 = vmatprep.subr.mxu0 %v221
    %457 = vmatpush1.msra.mxu0 %v220
    %458 = vmatprep.subr.mxu0 %v219
    %459 = vmatpush1.msra.mxu0 %v218
    %460 = vmatprep.subr.mxu0 %v217
    %461 = vmatpush1.msra.mxu0 %v216
    %462 = vmatprep.subr.mxu0 %v215
    %463 = vmatpush1.msra.mxu0 %v214
    %464 = vmatprep.subr.mxu0 %v277
    %465 = vmatpush2.msra.mxu0 %v276
    %466 = vmatprep.subr.mxu0 %v275
    %467 = vmatpush2.msra.mxu0 %v274
    %468 = vmatprep.subr.mxu0 %v273
    %469 = vmatpush2.msra.mxu0 %v272
    %470 = vmatprep.subr.mxu0 %v271
    %471 = vmatpush2.msra.mxu0 %v270
    %472 = vmatprep.subr.mxu0 %v269
    %473 = vmatpush2.msra.mxu0 %v268
    %474 = vmatprep.subr.mxu0 %v267
    %475 = vmatpush2.msra.mxu0 %v266
    %476 = vmatprep.subr.mxu0 %v265
    %477 = vmatpush2.msra.mxu0 %v264
    %478 = vmatprep.subr.mxu0 %v263
    %479 = vmatpush2.msra.mxu0 %v262
    %480 = vmatprep.subr.mxu0 %v261
    %481 = vmatpush2.msra.mxu0 %v260
    %482 = vmatprep.subr.mxu0 %v259
    %483 = vmatpush2.msra.mxu0 %v258
    %484 = vmatprep.subr.mxu0 %v257
    %485 = vmatpush2.msra.mxu0 %v256
    %486 = vmatprep.subr.mxu0 %v255
    %487 = vmatpush2.msra.mxu0 %v254
    %488 = vmatprep.subr.mxu0 %v253
    %489 = vmatpush2.msra.mxu0 %v252
    %490 = vmatprep.subr.mxu0 %v251
    %491 = vmatpush2.msra.mxu0 %v250
    %492 = vmatprep.subr.mxu0 %v249
    %493 = vmatpush2.msra.mxu0 %v248
    %494 = vmatprep.subr.mxu0 %v247
    %495 = vmatpush2.msra.mxu0 %v246
    %496 = vmatprep.mubr.f32.mxu0 %v85
    %497 = vmatmul.mubr.f32.gmra.mxu0 %v84
    %v498 = vpop.f32.mrf.mxu0
    %v499 = vadd.f32 %v428, %v498
    %v500 = vpop.f32.mrf.mxu0
    %v501 = vadd.f32 %v430, %v500
    %502 = vdwg.mxu0
    %v503 = vmax.f32 %v499, 0.0
    %v504 = vmax.f32 %v501, 0.0
    %v505 = vld [vmem:[%s7] sm:$0xff]
    %v506 = vld [vmem:[%s7 + $0x8] sm:$0xff]
    %v507 = vld [vmem:[%s7 + $0x10] sm:$0xff]
    %v508 = vld [vmem:[%s7 + $0x18] sm:$0xff]
    %v509 = vld [vmem:[%s7 + $0x20] sm:$0xff]
    %v510 = vld [vmem:[%s7 + $0x28] sm:$0xff]
    %v511 = vld [vmem:[%s7 + $0x30] sm:$0xff]
    %v512 = vld [vmem:[%s7 + $0x38] sm:$0xff]
    %v513 = vld [vmem:[%s7 + $0x40] sm:$0xff]
    %v514 = vld [vmem:[%s7 + $0x48] sm:$0xff]
    %v515 = vld [vmem:[%s7 + $0x50] sm:$0xff]
    %v516 = vld [vmem:[%s7 + $0x58] sm:$0xff]
    %v517 = vld [vmem:[%s7 + $0x60] sm:$0xff]
    %v518 = vld [vmem:[%s7 + $0x68] sm:$0xff]
    %v519 = vld [vmem:[%s7 + $0x70] sm:$0xff]
    %v520 = vld [vmem:[%s7 + $0x78] sm:$0xff]
    %v521 = vld [vmem:[%s7 + $0x80] sm:$0xff]
    %v522 = vld [vmem:[%s7 + $0x88] sm:$0xff]
    %v523 = vld [vmem:[%s7 + $0x90] sm:$0xff]
    %v524 = vld [vmem:[%s7 + $0x98] sm:$0xff]
    %v525 = vld [vmem:[%s7 + $0xa0] sm:$0xff]
    %v526 = vld [vmem:[%s7 + $0xa8] sm:$0xff]
    %v527 = vld [vmem:[%s7 + $0xb0] sm:$0xff]
    %v528 = vld [vmem:[%s7 + $0xb8] sm:$0xff]
    %v529 = vld [vmem:[%s7 + $0xc0] sm:$0xff]
    %v530 = vld [vmem:[%s7 + $0xc8] sm:$0xff]
    %v531 = vld [vmem:[%s7 + $0xd0] sm:$0xff]
    %v532 = vld [vmem:[%s7 + $0xd8] sm:$0xff]
    %v533 = vld [vmem:[%s7 + $0xe0] sm:$0xff]
    %v534 = vld [vmem:[%s7 + $0xe8] sm:$0xff]
    %v535 = vld [vmem:[%s7 + $0xf0] sm:$0xff]
    %v536 = vld [vmem:[%s7 + $0xf8] sm:$0xff]
    %v537 = vld [vmem:[%s8] sm:$0x1]
    %v539 = vlaneseq
    %v540 = vshrl.u32 %v539, 7
    %v541 = vsub.s32 0, %v540
    %v542 = vrot.slane %v537, %v541
    %544 = vmatprep.subr.mxu0 0.0
    %545 = vmatpush1.msra.mxu0 %v520
    %546 = vmatprep.subr.mxu0 0.0
    %547 = vmatpush1.msra.mxu0 %v519
    %548 = vmatprep.subr.mxu0 0.0
    %549 = vmatpush1.msra.mxu0 %v518
    %550 = vmatprep.subr.mxu0 0.0
    %551 = vmatpush1.msra.mxu0 %v517
    %552 = vmatprep.subr.mxu0 0.0
    %553 = vmatpush1.msra.mxu0 %v516
    %554 = vmatprep.subr.mxu0 0.0
    %555 = vmatpush1.msra.mxu0 %v515
    %556 = vmatprep.subr.mxu0 0.0
    %557 = vmatpush1.msra.mxu0 %v514
    %558 = vmatprep.subr.mxu0 0.0
    %559 = vmatpush1.msra.mxu0 %v513
    %560 = vmatprep.subr.mxu0 0.0
    %561 = vmatpush1.msra.mxu0 %v512
    %562 = vmatprep.subr.mxu0 0.0
    %563 = vmatpush1.msra.mxu0 %v511
    %564 = vmatprep.subr.mxu0 0.0
    %565 = vmatpush1.msra.mxu0 %v510
    %566 = vmatprep.subr.mxu0 0.0
    %567 = vmatpush1.msra.mxu0 %v509
    %568 = vmatprep.subr.mxu0 0.0
    %569 = vmatpush1.msra.mxu0 %v508
    %570 = vmatprep.subr.mxu0 0.0
    %571 = vmatpush1.msra.mxu0 %v507
    %572 = vmatprep.subr.mxu0 0.0
    %573 = vmatpush1.msra.mxu0 %v506
    %574 = vmatprep.subr.mxu0 0.0
    %575 = vmatpush1.msra.mxu0 %v505
    %576 = vmatprep.subr.mxu0 0.0
    %577 = vmatpush2.msra.mxu0 %v536
    %578 = vmatprep.subr.mxu0 0.0
    %579 = vmatpush2.msra.mxu0 %v535
    %580 = vmatprep.subr.mxu0 0.0
    %581 = vmatpush2.msra.mxu0 %v534
    %582 = vmatprep.subr.mxu0 0.0
    %583 = vmatpush2.msra.mxu0 %v533
    %584 = vmatprep.subr.mxu0 0.0
    %585 = vmatpush2.msra.mxu0 %v532
    %586 = vmatprep.subr.mxu0 0.0
    %587 = vmatpush2.msra.mxu0 %v531
    %588 = vmatprep.subr.mxu0 0.0
    %589 = vmatpush2.msra.mxu0 %v530
    %590 = vmatprep.subr.mxu0 0.0
    %591 = vmatpush2.msra.mxu0 %v529
    %592 = vmatprep.subr.mxu0 0.0
    %593 = vmatpush2.msra.mxu0 %v528
    %594 = vmatprep.subr.mxu0 0.0
    %595 = vmatpush2.msra.mxu0 %v527
    %596 = vmatprep.subr.mxu0 0.0
    %597 = vmatpush2.msra.mxu0 %v526
    %598 = vmatprep.subr.mxu0 0.0
    %599 = vmatpush2.msra.mxu0 %v525
    %600 = vmatprep.subr.mxu0 0.0
    %601 = vmatpush2.msra.mxu0 %v524
    %602 = vmatprep.subr.mxu0 0.0
    %603 = vmatpush2.msra.mxu0 %v523
    %604 = vmatprep.subr.mxu0 0.0
    %605 = vmatpush2.msra.mxu0 %v522
    %606 = vmatprep.subr.mxu0 0.0
    %607 = vmatpush2.msra.mxu0 %v521
    %608 = vmatprep.mubr.f32.mxu0 %v504
    %609 = vmatmul.mubr.f32.gmra.mxu0 %v503
    %v610 = vpop.f32.mrf.mxu0
    %v611 = vadd.f32 %v542, %v610
    %v612 = vpop.f32.mrf.mxu0
    %613 = vdwg.mxu0
    %v614 = vmax.f32 %v611, 0.0
    %v615 = vld [vmem:[%s9] sm:$0xff]
    %v616 = vld [vmem:[%s9 + $0x8] sm:$0xff]
    %v617 = vld [vmem:[%s9 + $0x10] sm:$0xff]
    %v618 = vld [vmem:[%s9 + $0x18] sm:$0xff]
    %v619 = vld [vmem:[%s10] sm:$0x1]
    %v620 = vld [vmem:[%s2] sm:$0xff]
    %v622 = vlaneseq
    %v623 = vshrl.u32 %v622, 7
    %v624 = vsub.s32 0, %v623
    %v625 = vrot.slane %v619, %v624
    %vm627 = vcmask 261120
    %v629 = vsel %vm627, %v620, 0
    %631 = vmatprep.subr.mxu0 0.0
    %632 = vmatpush1.msra.mxu0 0.0
    %633 = vmatprep.subr.mxu0 0.0
    %634 = vmatpush1.msra.mxu0 0.0
    %635 = vmatprep.subr.mxu0 0.0
    %636 = vmatpush1.msra.mxu0 0.0
    %637 = vmatprep.subr.mxu0 0.0
    %638 = vmatpush1.msra.mxu0 0.0
    %639 = vmatprep.subr.mxu0 0.0
    %640 = vmatpush1.msra.mxu0 0.0
    %641 = vmatprep.subr.mxu0 0.0
    %642 = vmatpush1.msra.mxu0 0.0
    %643 = vmatprep.subr.mxu0 0.0
    %644 = vmatpush1.msra.mxu0 0.0
    %645 = vmatprep.subr.mxu0 0.0
    %646 = vmatpush1.msra.mxu0 0.0
    %647 = vmatprep.subr.mxu0 0.0
    %648 = vmatpush1.msra.mxu0 0.0
    %649 = vmatprep.subr.mxu0 0.0
    %650 = vmatpush1.msra.mxu0 0.0
    %651 = vmatprep.subr.mxu0 0.0
    %652 = vmatpush1.msra.mxu0 0.0
    %653 = vmatprep.subr.mxu0 0.0
    %654 = vmatpush1.msra.mxu0 0.0
    %655 = vmatprep.subr.mxu0 0.0
    %656 = vmatpush1.msra.mxu0 %v618
    %657 = vmatprep.subr.mxu0 0.0
    %658 = vmatpush1.msra.mxu0 %v617
    %659 = vmatprep.subr.mxu0 0.0
    %660 = vmatpush1.msra.mxu0 %v616
    %661 = vmatprep.subr.mxu0 0.0
    %662 = vmatpush1.msra.mxu0 %v615
    %663 = vmatprep.subr.mxu0 0.0
    %664 = vmatpush2.msra.mxu0 0.0
    %665 = vmatprep.subr.mxu0 0.0
    %666 = vmatpush2.msra.mxu0 0.0
    %667 = vmatprep.subr.mxu0 0.0
    %668 = vmatpush2.msra.mxu0 0.0
    %669 = vmatprep.subr.mxu0 0.0
    %670 = vmatpush2.msra.mxu0 0.0
    %671 = vmatprep.subr.mxu0 0.0
    %672 = vmatpush2.msra.mxu0 0.0
    %673 = vmatprep.subr.mxu0 0.0
    %674 = vmatpush2.msra.mxu0 0.0
    %675 = vmatprep.subr.mxu0 0.0
    %676 = vmatpush2.msra.mxu0 0.0
    %677 = vmatprep.subr.mxu0 0.0
    %678 = vmatpush2.msra.mxu0 0.0
    %679 = vmatprep.subr.mxu0 0.0
    %680 = vmatpush2.msra.mxu0 0.0
    %681 = vmatprep.subr.mxu0 0.0
    %682 = vmatpush2.msra.mxu0 0.0
    %683 = vmatprep.subr.mxu0 0.0
    %684 = vmatpush2.msra.mxu0 0.0
    %685 = vmatprep.subr.mxu0 0.0
    %686 = vmatpush2.msra.mxu0 0.0
    %687 = vmatprep.subr.mxu0 0.0
    %688 = vmatpush2.msra.mxu0 0.0
    %689 = vmatprep.subr.mxu0 0.0
    %690 = vmatpush2.msra.mxu0 0.0
    %691 = vmatprep.subr.mxu0 0.0
    %692 = vmatpush2.msra.mxu0 0.0
    %693 = vmatprep.subr.mxu0 0.0
    %694 = vmatpush2.msra.mxu0 0.0
    %695 = vmatprep.mubr.f32.mxu0 0.0
    %696 = vmatmul.mubr.f32.gmra.mxu0 %v629
    %v697 = vpop.f32.mrf.mxu0
    %v698 = vadd.f32 %v625, %v697
    %v699 = vpop.f32.mrf.mxu0
    %700 = vdwg.mxu0
    %v701 = vld [vmem:[%s3] sm:$0xff]
    %v703 = vsel %vm627, %v701, 0
    %705 = vmatprep.subr.mxu0 0.0
    %706 = vmatpush1.msra.mxu0 0.0
    %707 = vmatprep.subr.mxu0 0.0
    %708 = vmatpush1.msra.mxu0 0.0
    %709 = vmatprep.subr.mxu0 0.0
    %710 = vmatpush1.msra.mxu0 0.0
    %711 = vmatprep.subr.mxu0 0.0
    %712 = vmatpush1.msra.mxu0 0.0
    %713 = vmatprep.subr.mxu0 0.0
    %714 = vmatpush1.msra.mxu0 0.0
    %715 = vmatprep.subr.mxu0 0.0
    %716 = vmatpush1.msra.mxu0 0.0
    %717 = vmatprep.subr.mxu0 0.0
    %718 = vmatpush1.msra.mxu0 0.0
    %719 = vmatprep.subr.mxu0 0.0
    %720 = vmatpush1.msra.mxu0 0.0
    %721 = vmatprep.subr.mxu0 0.0
    %722 = vmatpush1.msra.mxu0 0.0
    %723 = vmatprep.subr.mxu0 0.0
    %724 = vmatpush1.msra.mxu0 0.0
    %725 = vmatprep.subr.mxu0 0.0
    %726 = vmatpush1.msra.mxu0 0.0
    %727 = vmatprep.subr.mxu0 0.0
    %728 = vmatpush1.msra.mxu0 0.0
    %729 = vmatprep.subr.mxu0 0.0
    %730 = vmatpush1.msra.mxu0 %v618
    %731 = vmatprep.subr.mxu0 0.0
    %732 = vmatpush1.msra.mxu0 %v617
    %733 = vmatprep.subr.mxu0 0.0
    %734 = vmatpush1.msra.mxu0 %v616
    %735 = vmatprep.subr.mxu0 0.0
    %736 = vmatpush1.msra.mxu0 %v615
    %737 = vmatprep.subr.mxu0 0.0
    %738 = vmatpush2.msra.mxu0 0.0
    %739 = vmatprep.subr.mxu0 0.0
    %740 = vmatpush2.msra.mxu0 0.0
    %741 = vmatprep.subr.mxu0 0.0
    %742 = vmatpush2.msra.mxu0 0.0
    %743 = vmatprep.subr.mxu0 0.0
    %744 = vmatpush2.msra.mxu0 0.0
    %745 = vmatprep.subr.mxu0 0.0
    %746 = vmatpush2.msra.mxu0 0.0
    %747 = vmatprep.subr.mxu0 0.0
    %748 = vmatpush2.msra.mxu0 0.0
    %749 = vmatprep.subr.mxu0 0.0
    %750 = vmatpush2.msra.mxu0 0.0
    %751 = vmatprep.subr.mxu0 0.0
    %752 = vmatpush2.msra.mxu0 0.0
    %753 = vmatprep.subr.mxu0 0.0
    %754 = vmatpush2.msra.mxu0 0.0
    %755 = vmatprep.subr.mxu0 0.0
    %756 = vmatpush2.msra.mxu0 0.0
    %757 = vmatprep.subr.mxu0 0.0
    %758 = vmatpush2.msra.mxu0 0.0
    %759 = vmatprep.subr.mxu0 0.0
    %760 = vmatpush2.msra.mxu0 0.0
    %761 = vmatprep.subr.mxu0 0.0
    %762 = vmatpush2.msra.mxu0 0.0
    %763 = vmatprep.subr.mxu0 0.0
    %764 = vmatpush2.msra.mxu0 0.0
    %765 = vmatprep.subr.mxu0 0.0
    %766 = vmatpush2.msra.mxu0 0.0
    %767 = vmatprep.subr.mxu0 0.0
    %768 = vmatpush2.msra.mxu0 0.0
    %769 = vmatprep.mubr.f32.mxu0 0.0
    %770 = vmatmul.mubr.f32.gmra.mxu0 %v703
    %v771 = vpop.f32.mrf.mxu0
    %v772 = vadd.f32 %v625, %v771
    %v773 = vpop.f32.mrf.mxu0
    %774 = vdwg.mxu0
    %v775 = vld [vmem:[%s11] sm:$0xff]
    %v776 = vld [vmem:[%s11 + $0x8] sm:$0xff]
    %v777 = vld [vmem:[%s11 + $0x10] sm:$0xff]
    %v778 = vld [vmem:[%s11 + $0x18] sm:$0xff]
    %v779 = vld [vmem:[%s11 + $0x20] sm:$0xff]
    %v780 = vld [vmem:[%s11 + $0x28] sm:$0xff]
    %v781 = vld [vmem:[%s11 + $0x30] sm:$0xff]
    %v782 = vld [vmem:[%s11 + $0x38] sm:$0xff]
    %v783 = vld [vmem:[%s11 + $0x40] sm:$0xff]
    %v784 = vld [vmem:[%s11 + $0x48] sm:$0xff]
    %v785 = vld [vmem:[%s11 + $0x50] sm:$0xff]
    %v786 = vld [vmem:[%s11 + $0x58] sm:$0xff]
    %v787 = vld [vmem:[%s11 + $0x60] sm:$0xff]
    %v788 = vld [vmem:[%s11 + $0x68] sm:$0xff]
    %v789 = vld [vmem:[%s11 + $0x70] sm:$0xff]
    %v790 = vld [vmem:[%s11 + $0x78] sm:$0xff]
    %v791 = vld [vmem:[%s11 + $0x80] sm:$0xff]
    %v792 = vld [vmem:[%s11 + $0x88] sm:$0xff]
    %v793 = vld [vmem:[%s11 + $0x90] sm:$0xff]
    %v794 = vld [vmem:[%s11 + $0x98] sm:$0xff]
    %v795 = vld [vmem:[%s11 + $0xa0] sm:$0xff]
    %v796 = vld [vmem:[%s11 + $0xa8] sm:$0xff]
    %v797 = vld [vmem:[%s11 + $0xb0] sm:$0xff]
    %v798 = vld [vmem:[%s11 + $0xb8] sm:$0xff]
    %v799 = vld [vmem:[%s0] sm:$0xff]
    %800 = vmatprep.subr.mxu0 0.0
    %801 = vmatpush1.msra.mxu0 %v794
    %802 = vmatprep.subr.mxu0 0.0
    %803 = vmatpush1.msra.mxu0 %v793
    %804 = vmatprep.subr.mxu0 0.0
    %805 = vmatpush1.msra.mxu0 %v792
    %806 = vmatprep.subr.mxu0 0.0
    %807 = vmatpush1.msra.mxu0 %v791
    %808 = vmatprep.subr.mxu0 0.0
    %809 = vmatpush1.msra.mxu0 %v790
    %810 = vmatprep.subr.mxu0 0.0
    %811 = vmatpush1.msra.mxu0 %v789
    %812 = vmatprep.subr.mxu0 0.0
    %813 = vmatpush1.msra.mxu0 %v788
    %814 = vmatprep.subr.mxu0 0.0
    %815 = vmatpush1.msra.mxu0 %v787
    %816 = vmatprep.subr.mxu0 0.0
    %817 = vmatpush1.msra.mxu0 %v786
    %818 = vmatprep.subr.mxu0 0.0
    %819 = vmatpush1.msra.mxu0 %v785
    %820 = vmatprep.subr.mxu0 0.0
    %821 = vmatpush1.msra.mxu0 %v784
    %822 = vmatprep.subr.mxu0 0.0
    %823 = vmatpush1.msra.mxu0 %v783
    %824 = vmatprep.subr.mxu0 0.0
    %825 = vmatpush1.msra.mxu0 %v782
    %826 = vmatprep.subr.mxu0 0.0
    %827 = vmatpush1.msra.mxu0 %v781
    %828 = vmatprep.subr.mxu0 0.0
    %829 = vmatpush1.msra.mxu0 %v780
    %830 = vmatprep.subr.mxu0 0.0
    %831 = vmatpush1.msra.mxu0 %v779
    %832 = vmatprep.subr.mxu0 0.0
    %833 = vmatpush2.msra.mxu0 0.0
    %834 = vmatprep.subr.mxu0 0.0
    %835 = vmatpush2.msra.mxu0 0.0
    %836 = vmatprep.subr.mxu0 0.0
    %837 = vmatpush2.msra.mxu0 0.0
    %838 = vmatprep.subr.mxu0 0.0
    %839 = vmatpush2.msra.mxu0 0.0
    %840 = vmatprep.subr.mxu0 0.0
    %841 = vmatpush2.msra.mxu0 0.0
    %842 = vmatprep.subr.mxu0 0.0
    %843 = vmatpush2.msra.mxu0 0.0
    %844 = vmatprep.subr.mxu0 0.0
    %845 = vmatpush2.msra.mxu0 0.0
    %846 = vmatprep.subr.mxu0 0.0
    %847 = vmatpush2.msra.mxu0 0.0
    %848 = vmatprep.subr.mxu0 0.0
    %849 = vmatpush2.msra.mxu0 0.0
    %850 = vmatprep.subr.mxu0 0.0
    %851 = vmatpush2.msra.mxu0 0.0
    %852 = vmatprep.subr.mxu0 0.0
    %853 = vmatpush2.msra.mxu0 0.0
    %854 = vmatprep.subr.mxu0 0.0
    %855 = vmatpush2.msra.mxu0 0.0
    %856 = vmatprep.subr.mxu0 0.0
    %857 = vmatpush2.msra.mxu0 0.0
    %858 = vmatprep.subr.mxu0 0.0
    %859 = vmatpush2.msra.mxu0 0.0
    %860 = vmatprep.subr.mxu0 0.0
    %861 = vmatpush2.msra.mxu0 0.0
    %862 = vmatprep.subr.mxu0 0.0
    %863 = vmatpush2.msra.mxu0 0.0
    %864 = vmatprep.mubr.f32.mxu0 0.0
    %865 = vmatmul.mubr.f32.gmra.mxu0 %v614
    %v866 = vpop.f32.mrf.mxu0
    %v867 = vadd.f32 0.0, %v866
    %v868 = vpop.f32.mrf.mxu0
    %869 = vdwg.mxu0
    %v871 = vsel %vm627, %v799, 0
    %873 = vmatprep.subr.mxu0 0.0
    %874 = vmatpush1.msra.mxu0 0.0
    %875 = vmatprep.subr.mxu0 0.0
    %876 = vmatpush1.msra.mxu0 0.0
    %877 = vmatprep.subr.mxu0 0.0
    %878 = vmatpush1.msra.mxu0 0.0
    %879 = vmatprep.subr.mxu0 0.0
    %880 = vmatpush1.msra.mxu0 0.0
    %881 = vmatprep.subr.mxu0 0.0
    %882 = vmatpush1.msra.mxu0 0.0
    %883 = vmatprep.subr.mxu0 0.0
    %884 = vmatpush1.msra.mxu0 0.0
    %885 = vmatprep.subr.mxu0 0.0
    %886 = vmatpush1.msra.mxu0 0.0
    %887 = vmatprep.subr.mxu0 0.0
    %888 = vmatpush1.msra.mxu0 0.0
    %889 = vmatprep.subr.mxu0 0.0
    %890 = vmatpush1.msra.mxu0 0.0
    %891 = vmatprep.subr.mxu0 0.0
    %892 = vmatpush1.msra.mxu0 0.0
    %893 = vmatprep.subr.mxu0 0.0
    %894 = vmatpush1.msra.mxu0 0.0
    %895 = vmatprep.subr.mxu0 0.0
    %896 = vmatpush1.msra.mxu0 0.0
    %897 = vmatprep.subr.mxu0 0.0
    %898 = vmatpush1.msra.mxu0 %v778
    %899 = vmatprep.subr.mxu0 0.0
    %900 = vmatpush1.msra.mxu0 %v777
    %901 = vmatprep.subr.mxu0 0.0
    %902 = vmatpush1.msra.mxu0 %v776
    %903 = vmatprep.subr.mxu0 0.0
    %904 = vmatpush1.msra.mxu0 %v775
    %905 = vmatprep.subr.mxu0 0.0
    %906 = vmatpush2.msra.mxu0 0.0
    %907 = vmatprep.subr.mxu0 0.0
    %908 = vmatpush2.msra.mxu0 0.0
    %909 = vmatprep.subr.mxu0 0.0
    %910 = vmatpush2.msra.mxu0 0.0
    %911 = vmatprep.subr.mxu0 0.0
    %912 = vmatpush2.msra.mxu0 0.0
    %913 = vmatprep.subr.mxu0 0.0
    %914 = vmatpush2.msra.mxu0 0.0
    %915 = vmatprep.subr.mxu0 0.0
    %916 = vmatpush2.msra.mxu0 0.0
    %917 = vmatprep.subr.mxu0 0.0
    %918 = vmatpush2.msra.mxu0 0.0
    %919 = vmatprep.subr.mxu0 0.0
    %920 = vmatpush2.msra.mxu0 0.0
    %921 = vmatprep.subr.mxu0 0.0
    %922 = vmatpush2.msra.mxu0 0.0
    %923 = vmatprep.subr.mxu0 0.0
    %924 = vmatpush2.msra.mxu0 0.0
    %925 = vmatprep.subr.mxu0 0.0
    %926 = vmatpush2.msra.mxu0 0.0
    %927 = vmatprep.subr.mxu0 0.0
    %928 = vmatpush2.msra.mxu0 0.0
    %929 = vmatprep.subr.mxu0 0.0
    %930 = vmatpush2.msra.mxu0 0.0
    %931 = vmatprep.subr.mxu0 0.0
    %932 = vmatpush2.msra.mxu0 0.0
    %933 = vmatprep.subr.mxu0 0.0
    %934 = vmatpush2.msra.mxu0 0.0
    %935 = vmatprep.subr.mxu0 0.0
    %936 = vmatpush2.msra.mxu0 0.0
    %937 = vmatprep.mubr.f32.mxu0 0.0
    %938 = vmatmul.mubr.f32.gmra.mxu0 %v871
    %v939 = vpop.f32.mrf.mxu0
    %v940 = vadd.f32 %v867, %v939
    %v941 = vpop.f32.mrf.mxu0
    %942 = vdwg.mxu0
    %vm943 = vcmask 130048
    %v945 = vsel %vm943, %v698, 0
    %947 = vmatprep.subr.mxu0 0.0
    %948 = vmatpush1.msra.mxu0 0.0
    %949 = vmatprep.subr.mxu0 0.0
    %950 = vmatpush1.msra.mxu0 0.0
    %951 = vmatprep.subr.mxu0 0.0
    %952 = vmatpush1.msra.mxu0 0.0
    %953 = vmatprep.subr.mxu0 0.0
    %954 = vmatpush1.msra.mxu0 0.0
    %955 = vmatprep.subr.mxu0 0.0
    %956 = vmatpush1.msra.mxu0 0.0
    %957 = vmatprep.subr.mxu0 0.0
    %958 = vmatpush1.msra.mxu0 0.0
    %959 = vmatprep.subr.mxu0 0.0
    %960 = vmatpush1.msra.mxu0 0.0
    %961 = vmatprep.subr.mxu0 0.0
    %962 = vmatpush1.msra.mxu0 0.0
    %963 = vmatprep.subr.mxu0 0.0
    %964 = vmatpush1.msra.mxu0 0.0
    %965 = vmatprep.subr.mxu0 0.0
    %966 = vmatpush1.msra.mxu0 0.0
    %967 = vmatprep.subr.mxu0 0.0
    %968 = vmatpush1.msra.mxu0 0.0
    %969 = vmatprep.subr.mxu0 0.0
    %970 = vmatpush1.msra.mxu0 0.0
    %971 = vmatprep.subr.mxu0 0.0
    %972 = vmatpush1.msra.mxu0 0.0
    %973 = vmatprep.subr.mxu0 0.0
    %974 = vmatpush1.msra.mxu0 0.0
    %975 = vmatprep.subr.mxu0 0.0
    %976 = vmatpush1.msra.mxu0 %v796
    %977 = vmatprep.subr.mxu0 0.0
    %978 = vmatpush1.msra.mxu0 %v795
    %979 = vmatprep.subr.mxu0 0.0
    %980 = vmatpush2.msra.mxu0 0.0
    %981 = vmatprep.subr.mxu0 0.0
    %982 = vmatpush2.msra.mxu0 0.0
    %983 = vmatprep.subr.mxu0 0.0
    %984 = vmatpush2.msra.mxu0 0.0
    %985 = vmatprep.subr.mxu0 0.0
    %986 = vmatpush2.msra.mxu0 0.0
    %987 = vmatprep.subr.mxu0 0.0
    %988 = vmatpush2.msra.mxu0 0.0
    %989 = vmatprep.subr.mxu0 0.0
    %990 = vmatpush2.msra.mxu0 0.0
    %991 = vmatprep.subr.mxu0 0.0
    %992 = vmatpush2.msra.mxu0 0.0
    %993 = vmatprep.subr.mxu0 0.0
    %994 = vmatpush2.msra.mxu0 0.0
    %995 = vmatprep.subr.mxu0 0.0
    %996 = vmatpush2.msra.mxu0 0.0
    %997 = vmatprep.subr.mxu0 0.0
    %998 = vmatpush2.msra.mxu0 0.0
    %999 = vmatprep.subr.mxu0 0.0
    %1000 = vmatpush2.msra.mxu0 0.0
    %1001 = vmatprep.subr.mxu0 0.0
    %1002 = vmatpush2.msra.mxu0 0.0
    %1003 = vmatprep.subr.mxu0 0.0
    %1004 = vmatpush2.msra.mxu0 0.0
    %1005 = vmatprep.subr.mxu0 0.0
    %1006 = vmatpush2.msra.mxu0 0.0
    %1007 = vmatprep.subr.mxu0 0.0
    %1008 = vmatpush2.msra.mxu0 0.0
    %1009 = vmatprep.subr.mxu0 0.0
    %1010 = vmatpush2.msra.mxu0 0.0
    %1011 = vmatprep.mubr.f32.mxu0 0.0
    %1012 = vmatmul.mubr.f32.gmra.mxu0 %v945
    %v1013 = vpop.f32.mrf.mxu0
    %v1014 = vadd.f32 0.0, %v1013
    %v1015 = vpop.f32.mrf.mxu0
    %1016 = vdwg.mxu0
    %v1017 = vadd.f32 %v940, %v1014
    %v1019 = vsel %vm943, %v772, 0
    %1021 = vmatprep.subr.mxu0 0.0
    %1022 = vmatpush1.msra.mxu0 0.0
    %1023 = vmatprep.subr.mxu0 0.0
    %1024 = vmatpush1.msra.mxu0 0.0
    %1025 = vmatprep.subr.mxu0 0.0
    %1026 = vmatpush1.msra.mxu0 0.0
    %1027 = vmatprep.subr.mxu0 0.0
    %1028 = vmatpush1.msra.mxu0 0.0
    %1029 = vmatprep.subr.mxu0 0.0
    %1030 = vmatpush1.msra.mxu0 0.0
    %1031 = vmatprep.subr.mxu0 0.0
    %1032 = vmatpush1.msra.mxu0 0.0
    %1033 = vmatprep.subr.mxu0 0.0
    %1034 = vmatpush1.msra.mxu0 0.0
    %1035 = vmatprep.subr.mxu0 0.0
    %1036 = vmatpush1.msra.mxu0 0.0
    %1037 = vmatprep.subr.mxu0 0.0
    %1038 = vmatpush1.msra.mxu0 0.0
    %1039 = vmatprep.subr.mxu0 0.0
    %1040 = vmatpush1.msra.mxu0 0.0
    %1041 = vmatprep.subr.mxu0 0.0
    %1042 = vmatpush1.msra.mxu0 0.0
    %1043 = vmatprep.subr.mxu0 0.0
    %1044 = vmatpush1.msra.mxu0 0.0
    %1045 = vmatprep.subr.mxu0 0.0
    %1046 = vmatpush1.msra.mxu0 0.0
    %1047 = vmatprep.subr.mxu0 0.0
    %1048 = vmatpush1.msra.mxu0 0.0
    %1049 = vmatprep.subr.mxu0 0.0
    %1050 = vmatpush1.msra.mxu0 %v798
    %1051 = vmatprep.subr.mxu0 0.0
    %1052 = vmatpush1.msra.mxu0 %v797
    %1053 = vmatprep.subr.mxu0 0.0
    %1054 = vmatpush2.msra.mxu0 0.0
    %1055 = vmatprep.subr.mxu0 0.0
    %1056 = vmatpush2.msra.mxu0 0.0
    %1057 = vmatprep.subr.mxu0 0.0
    %1058 = vmatpush2.msra.mxu0 0.0
    %1059 = vmatprep.subr.mxu0 0.0
    %1060 = vmatpush2.msra.mxu0 0.0
    %1061 = vmatprep.subr.mxu0 0.0
    %1062 = vmatpush2.msra.mxu0 0.0
    %1063 = vmatprep.subr.mxu0 0.0
    %1064 = vmatpush2.msra.mxu0 0.0
    %1065 = vmatprep.subr.mxu0 0.0
    %1066 = vmatpush2.msra.mxu0 0.0
    %1067 = vmatprep.subr.mxu0 0.0
    %1068 = vmatpush2.msra.mxu0 0.0
    %1069 = vmatprep.subr.mxu0 0.0
    %1070 = vmatpush2.msra.mxu0 0.0
    %1071 = vmatprep.subr.mxu0 0.0
    %1072 = vmatpush2.msra.mxu0 0.0
    %1073 = vmatprep.subr.mxu0 0.0
    %1074 = vmatpush2.msra.mxu0 0.0
    %1075 = vmatprep.subr.mxu0 0.0
    %1076 = vmatpush2.msra.mxu0 0.0
    %1077 = vmatprep.subr.mxu0 0.0
    %1078 = vmatpush2.msra.mxu0 0.0
    %1079 = vmatprep.subr.mxu0 0.0
    %1080 = vmatpush2.msra.mxu0 0.0
    %1081 = vmatprep.subr.mxu0 0.0
    %1082 = vmatpush2.msra.mxu0 0.0
    %1083 = vmatprep.subr.mxu0 0.0
    %1084 = vmatpush2.msra.mxu0 0.0
    %1085 = vmatprep.mubr.f32.mxu0 0.0
    %1086 = vmatmul.mubr.f32.gmra.mxu0 %v1019
    %v1087 = vpop.f32.mrf.mxu0
    %v1088 = vadd.f32 0.0, %v1087
    %v1089 = vpop.f32.mrf.mxu0
    %1090 = vdwg.mxu0
    %v1091 = vadd.f32 %v1017, %v1088
    %v1092 = vld [vmem:[%s12] sm:$0x1]
    %v1094 = vlaneseq
    %v1095 = vshrl.u32 %v1094, 7
    %v1096 = vsub.s32 0, %v1095
    %v1097 = vrot.slane %v1092, %v1096
    %v1099 = vadd.f32 %v1091, %v1097
    %v1100 = vmax.f32 %v1099, 0.0
    %v1101 = vld [vmem:[%s13] sm:$0xff]
    %v1102 = vld [vmem:[%s13 + $0x8] sm:$0xff]
    %v1103 = vld [vmem:[%s13 + $0x10] sm:$0xff]
    %v1104 = vld [vmem:[%s13 + $0x18] sm:$0xff]
    %v1105 = vld [vmem:[%s13 + $0x20] sm:$0xff]
    %v1106 = vld [vmem:[%s13 + $0x28] sm:$0xff]
    %v1107 = vld [vmem:[%s13 + $0x30] sm:$0xff]
    %v1108 = vld [vmem:[%s13 + $0x38] sm:$0xff]
    %v1109 = vld [vmem:[%s14] sm:$0x1]
    %v1111 = vlaneseq
    %v1112 = vshrl.u32 %v1111, 7
    %v1113 = vsub.s32 0, %v1112
    %v1114 = vrot.slane %v1109, %v1113
    %vm1116 = vcmask 523264
    %v1118 = vsel %vm1116, %v1100, 0
    %1120 = vmatprep.subr.mxu0 0.0
    %1121 = vmatpush1.msra.mxu0 0.0
    %1122 = vmatprep.subr.mxu0 0.0
    %1123 = vmatpush1.msra.mxu0 0.0
    %1124 = vmatprep.subr.mxu0 0.0
    %1125 = vmatpush1.msra.mxu0 0.0
    %1126 = vmatprep.subr.mxu0 0.0
    %1127 = vmatpush1.msra.mxu0 0.0
    %1128 = vmatprep.subr.mxu0 0.0
    %1129 = vmatpush1.msra.mxu0 0.0
    %1130 = vmatprep.subr.mxu0 0.0
    %1131 = vmatpush1.msra.mxu0 0.0
    %1132 = vmatprep.subr.mxu0 0.0
    %1133 = vmatpush1.msra.mxu0 0.0
    %1134 = vmatprep.subr.mxu0 0.0
    %1135 = vmatpush1.msra.mxu0 0.0
    %1136 = vmatprep.subr.mxu0 0.0
    %1137 = vmatpush1.msra.mxu0 %v1108
    %1138 = vmatprep.subr.mxu0 0.0
    %1139 = vmatpush1.msra.mxu0 %v1107
    %1140 = vmatprep.subr.mxu0 0.0
    %1141 = vmatpush1.msra.mxu0 %v1106
    %1142 = vmatprep.subr.mxu0 0.0
    %1143 = vmatpush1.msra.mxu0 %v1105
    %1144 = vmatprep.subr.mxu0 0.0
    %1145 = vmatpush1.msra.mxu0 %v1104
    %1146 = vmatprep.subr.mxu0 0.0
    %1147 = vmatpush1.msra.mxu0 %v1103
    %1148 = vmatprep.subr.mxu0 0.0
    %1149 = vmatpush1.msra.mxu0 %v1102
    %1150 = vmatprep.subr.mxu0 0.0
    %1151 = vmatpush1.msra.mxu0 %v1101
    %1152 = vmatprep.subr.mxu0 0.0
    %1153 = vmatpush2.msra.mxu0 0.0
    %1154 = vmatprep.subr.mxu0 0.0
    %1155 = vmatpush2.msra.mxu0 0.0
    %1156 = vmatprep.subr.mxu0 0.0
    %1157 = vmatpush2.msra.mxu0 0.0
    %1158 = vmatprep.subr.mxu0 0.0
    %1159 = vmatpush2.msra.mxu0 0.0
    %1160 = vmatprep.subr.mxu0 0.0
    %1161 = vmatpush2.msra.mxu0 0.0
    %1162 = vmatprep.subr.mxu0 0.0
    %1163 = vmatpush2.msra.mxu0 0.0
    %1164 = vmatprep.subr.mxu0 0.0
    %1165 = vmatpush2.msra.mxu0 0.0
    %1166 = vmatprep.subr.mxu0 0.0
    %1167 = vmatpush2.msra.mxu0 0.0
    %1168 = vmatprep.subr.mxu0 0.0
    %1169 = vmatpush2.msra.mxu0 0.0
    %1170 = vmatprep.subr.mxu0 0.0
    %1171 = vmatpush2.msra.mxu0 0.0
    %1172 = vmatprep.subr.mxu0 0.0
    %1173 = vmatpush2.msra.mxu0 0.0
    %1174 = vmatprep.subr.mxu0 0.0
    %1175 = vmatpush2.msra.mxu0 0.0
    %1176 = vmatprep.subr.mxu0 0.0
    %1177 = vmatpush2.msra.mxu0 0.0
    %1178 = vmatprep.subr.mxu0 0.0
    %1179 = vmatpush2.msra.mxu0 0.0
    %1180 = vmatprep.subr.mxu0 0.0
    %1181 = vmatpush2.msra.mxu0 0.0
    %1182 = vmatprep.subr.mxu0 0.0
    %1183 = vmatpush2.msra.mxu0 0.0
    %1184 = vmatprep.mubr.f32.mxu0 0.0
    %1185 = vmatmul.mubr.f32.gmra.mxu0 %v1118
    %v1186 = vpop.f32.mrf.mxu0
    %v1187 = vadd.f32 %v1114, %v1186
    %v1188 = vpop.f32.mrf.mxu0
    %1189 = vdwg.mxu0
    %1190 = vst.msk [vmem:[%s20] sm:$0xff] %vm627, %v1187
    %v1191 = vld [vmem:[%s4] sm:$0xff]
    %v1192 = vmul.f32 %v1187, 0.5
    %v1193 = vmul.f32 %v1192, 1.442695
    %v1194 = vpow.pop %v1193
    %1196 = vrot.lane.b32.xlu0 %v1194, 112
    %v1197 = vpop.permute.xlu0 %1196
    %v1199 = vmul.f32 %v1191, %v1197
    %v1200 = vadd.f32 %v1187, %v1199
    %v1201 = vld [vmem:[%s15] sm:$0xff]
    %v1202 = vld [vmem:[%s15 + $0x8] sm:$0xff]
    %v1203 = vld [vmem:[%s16] sm:$0x1]
    %v1205 = vlaneseq
    %v1206 = vshrl.u32 %v1205, 7
    %v1207 = vsub.s32 0, %v1206
    %v1208 = vrot.slane %v1203, %v1207
    %v1211 = vsel %vm943, %v1200, 0
    %1213 = vmatprep.subr.mxu0 0.0
    %1214 = vmatpush1.msra.mxu0 0.0
    %1215 = vmatprep.subr.mxu0 0.0
    %1216 = vmatpush1.msra.mxu0 0.0
    %1217 = vmatprep.subr.mxu0 0.0
    %1218 = vmatpush1.msra.mxu0 0.0
    %1219 = vmatprep.subr.mxu0 0.0
    %1220 = vmatpush1.msra.mxu0 0.0
    %1221 = vmatprep.subr.mxu0 0.0
    %1222 = vmatpush1.msra.mxu0 0.0
    %1223 = vmatprep.subr.mxu0 0.0
    %1224 = vmatpush1.msra.mxu0 0.0
    %1225 = vmatprep.subr.mxu0 0.0
    %1226 = vmatpush1.msra.mxu0 0.0
    %1227 = vmatprep.subr.mxu0 0.0
    %1228 = vmatpush1.msra.mxu0 0.0
    %1229 = vmatprep.subr.mxu0 0.0
    %1230 = vmatpush1.msra.mxu0 0.0
    %1231 = vmatprep.subr.mxu0 0.0
    %1232 = vmatpush1.msra.mxu0 0.0
    %1233 = vmatprep.subr.mxu0 0.0
    %1234 = vmatpush1.msra.mxu0 0.0
    %1235 = vmatprep.subr.mxu0 0.0
    %1236 = vmatpush1.msra.mxu0 0.0
    %1237 = vmatprep.subr.mxu0 0.0
    %1238 = vmatpush1.msra.mxu0 0.0
    %1239 = vmatprep.subr.mxu0 0.0
    %1240 = vmatpush1.msra.mxu0 0.0
    %1241 = vmatprep.subr.mxu0 0.0
    %1242 = vmatpush1.msra.mxu0 %v1202
    %1243 = vmatprep.subr.mxu0 0.0
    %1244 = vmatpush1.msra.mxu0 %v1201
    %1245 = vmatprep.subr.mxu0 0.0
    %1246 = vmatpush2.msra.mxu0 0.0
    %1247 = vmatprep.subr.mxu0 0.0
    %1248 = vmatpush2.msra.mxu0 0.0
    %1249 = vmatprep.subr.mxu0 0.0
    %1250 = vmatpush2.msra.mxu0 0.0
    %1251 = vmatprep.subr.mxu0 0.0
    %1252 = vmatpush2.msra.mxu0 0.0
    %1253 = vmatprep.subr.mxu0 0.0
    %1254 = vmatpush2.msra.mxu0 0.0
    %1255 = vmatprep.subr.mxu0 0.0
    %1256 = vmatpush2.msra.mxu0 0.0
    %1257 = vmatprep.subr.mxu0 0.0
    %1258 = vmatpush2.msra.mxu0 0.0
    %1259 = vmatprep.subr.mxu0 0.0
    %1260 = vmatpush2.msra.mxu0 0.0
    %1261 = vmatprep.subr.mxu0 0.0
    %1262 = vmatpush2.msra.mxu0 0.0
    %1263 = vmatprep.subr.mxu0 0.0
    %1264 = vmatpush2.msra.mxu0 0.0
    %1265 = vmatprep.subr.mxu0 0.0
    %1266 = vmatpush2.msra.mxu0 0.0
    %1267 = vmatprep.subr.mxu0 0.0
    %1268 = vmatpush2.msra.mxu0 0.0
    %1269 = vmatprep.subr.mxu0 0.0
    %1270 = vmatpush2.msra.mxu0 0.0
    %1271 = vmatprep.subr.mxu0 0.0
    %1272 = vmatpush2.msra.mxu0 0.0
    %1273 = vmatprep.subr.mxu0 0.0
    %1274 = vmatpush2.msra.mxu0 0.0
    %1275 = vmatprep.subr.mxu0 0.0
    %1276 = vmatpush2.msra.mxu0 0.0
    %1277 = vmatprep.mubr.f32.mxu0 0.0
    %1278 = vmatmul.mubr.f32.gmra.mxu0 %v1211
    %v1279 = vpop.f32.mrf.mxu0
    %v1280 = vadd.f32 %v1208, %v1279
    %v1281 = vpop.f32.mrf.mxu0
    %1282 = vdwg.mxu0
    %v1283 = vmax.f32 %v1280, 0.0
    %v1284 = vld [vmem:[%s17] sm:$0x1]
    %v1286 = vlaneseq
    %v1287 = vshrl.u32 %v1286, 7
    %v1288 = vsub.s32 0, %v1287
    %v1289 = vrot.slane %v1284, %v1288
    %v1291 = vmul.f32 %v1283, %v1289
    %v1292 = vsel %vm1116, %v1291, 0.0
    %1293 = vadd.xlane.f32.xlu0 %v1292
    %v1294 = vpop.xlane.xlu0 %1293
    %v1295 = vld [vmem:[#allocation2] sm:$0x1]
    %v1297 = vlaneseq
    %v1298 = vshrl.u32 %v1297, 7
    %v1299 = vsub.s32 0, %v1298
    %v1300 = vrot.slane %v1295, %v1299
    %v1302 = vadd.f32 %v1294, %v1300
    %vm1303 = vcmask 7168
    %1304 = vst.msk [vmem:[%s19] sm:$0xff] %vm1303, %v1302
    // Predicated region
    $region82: #{cvae_forward.1} parent=1 // pred_check
      _
    $region83: #{cvae_forward.1} parent=1 // pred_check_branch
      %1306 = sbr.rel (0) target = $region85
    $region84: #{cvae_forward.1} parent=1 // pred_region
      _
    $region85: #{cvae_forward.1} parent=1 // pred_fallthru
      _
    // Predicated region
    $region86: #{cvae_forward.1} parent=1 // pred_check
      _
    $region87: #{cvae_forward.1} parent=1 // pred_check_branch
      %1308 = sbr.rel (0) target = $region89
    $region88: #{cvae_forward.1} parent=1 // pred_region
      _
    $region89: #{cvae_forward.1} parent=1 // pred_fallthru
      _
    // Predicated region
    $region90: #{cvae_forward.1} parent=1 // pred_check
      _
    $region91: #{cvae_forward.1} parent=1 // pred_check_branch
      %1310 = sbr.rel (0) target = $region93
    $region92: #{cvae_forward.1} parent=1 // pred_region
      _
    $region93: #{cvae_forward.1} parent=1 // pred_fallthru
      _
    // Predicated region
    $region94: #{cvae_forward.1} parent=1 // pred_check
      _
    $region95: #{cvae_forward.1} parent=1 // pred_check_branch
      %1312 = sbr.rel (0) target = $region97
    $region96: #{cvae_forward.1} parent=1 // pred_region
      _
    $region97: #{cvae_forward.1} parent=1 // pred_fallthru
      _
    %1313 = vsyncpa [#allocation4], 1

</llo_original>
